<compile_context>
chip_gen: v6e
topology: v6e:2x2x1
jax: 0.10.0
libtpu: 0.0.40
codegen_flags: <defaults>
</compile_context>

<pallas_src>
import functools

import jax
import jax.numpy as jnp
from jax.experimental import pallas as pl
from jax.experimental.pallas import tpu as pltpu


def _round_up(n: int, m: int) -> int:
    return ((n + m - 1) // m) * m


def _qlayer_kernel(x_ref, w_ref, theta_ref, o_ref):
    # x_ref:     (TILE_B, F)      streamed batch tile (f32)
    # w_ref:     (F, O_pad)       VMEM-resident across the grid
    # theta_ref: (1, O_pad)       VMEM-resident across the grid
    # o_ref:     (TILE_B, O_pad)  streamed, lane-dense (O_pad % 128 == 0)
    z = jnp.dot(
        x_ref[...],
        w_ref[...],
        preferred_element_type=jnp.float32,
        precision=jax.lax.Precision.HIGHEST,  # tiny matmul; keep f32 parity
    )
    o_ref[...] = jnp.cos(z + theta_ref[...]).astype(o_ref.dtype)


def _pick_tile_b(batch: int, tile_b: int) -> int:
    """Batch tile: multiple of 8 sublanes, capped so we get >=2 grid steps
    whenever the batch allows it (v7x megacore sharding)."""
    tb = min(tile_b, _round_up(batch, 8))
    if batch > 8:
        tb = min(tb, max(_round_up(pl.cdiv(batch, 2), 8), 8))
    return max(tb, 8)


@functools.partial(jax.jit, static_argnames=("tile_b",))
def qnn_forward(x, w, theta, *, tile_b: int = 4096):
    """QNN.forward(x) -> qlayer(x).

    x:     (B, F) float32
    w:     (F, O) float32   (transposed variational-layer weight)
    theta: (1, O) float32   (per-qubit rotation offsets)
    returns (B, O) float32 expectation values in [-1, 1].
    """
    B, F = x.shape
    Fw, O = w.shape
    assert Fw == F and theta.shape == (1, O)

    # Lane-dense output axis (multiple of 128). Only the tiny, reused
    # parameters get padded; x is fed to the kernel untouched.
    o_pad = _round_up(max(O, 128), 128)
    w_p = jnp.pad(w, ((0, 0), (0, o_pad - O)))
    theta_p = jnp.pad(theta, ((0, 0), (0, o_pad - O)))

    tb = _pick_tile_b(B, tile_b)
    grid = (pl.cdiv(B, tb),)  # partial edge block is masked by Pallas

    cost = pl.CostEstimate(
        flops=2 * B * F * o_pad,
        transcendentals=B * o_pad,
        bytes_accessed=(B * F + F * o_pad + o_pad + B * o_pad) * 4,
    )

    out_padded = pl.pallas_call(
        _qlayer_kernel,
        out_shape=jax.ShapeDtypeStruct((B, o_pad), jnp.float32),
        grid=grid,
        in_specs=[
            pl.BlockSpec((tb, F), lambda i: (i, 0)),       # streamed batch tiles
            pl.BlockSpec((F, o_pad), lambda i: (0, 0)),    # resident weight
            pl.BlockSpec((1, o_pad), lambda i: (0, 0)),    # resident theta
        ],
        out_specs=pl.BlockSpec((tb, o_pad), lambda i: (i, 0)),
        compiler_params=pltpu.CompilerParams(
            dimension_semantics=("parallel",),             # independent batch tiles
        ),
        cost_estimate=cost,
    )(x, w_p, theta_p)

    return out_padded[:, :O]


if __name__ == "__main__":
    key = jax.random.PRNGKey(0)
    kx, kw, kt = jax.random.split(key, 3)

    batch = 256        # B (splits into >=2 tiles -> exercises pipelining / megacore)
    in_features = 32   # number of encoded input angles
    out_features = 8   # number of measured qubits / outputs

    x = jax.random.normal(kx, (batch, in_features), dtype=jnp.float32)
    # Deterministic "trainable" parameters of the variational circuit.
    w = 0.1 * jax.random.normal(kw, (in_features, out_features), dtype=jnp.float32)
    theta = 0.1 * jax.random.normal(kt, (1, out_features), dtype=jnp.float32)

    out = qnn_forward(x, w, theta)
    out = jax.block_until_ready(out)
    assert out.shape == (batch, out_features)

    # Pure-JAX reference with matching (full f32) precision.
    ref = jnp.cos(
        jnp.dot(x, w, precision=jax.lax.Precision.HIGHEST) + theta)
    assert jnp.allclose(out, ref, atol=1e-4), "mismatch vs f32 reference"
    assert jnp.all(jnp.abs(out) <= 1.0 + 1e-6), "expectation values out of range"

    print("KERNEL_OK")
</pallas_src>

<mosaic_0001>
module attributes {stable_mosaic.version = 11 : i64} {
  func.func @_qlayer_kernel(%arg0: i32, %arg1: memref<128x32xf32, #tpu.memory_space<vmem>>, %arg2: memref<32x128xf32, #tpu.memory_space<vmem>>, %arg3: memref<1x128xf32, #tpu.memory_space<vmem>>, %arg4: memref<128x128xf32, #tpu.memory_space<vmem>>) attributes {dimension_semantics = [#tpu.dimension_semantics<parallel>], iteration_bounds = array<i64: 2>, scalar_prefetch = 0 : i64, scratch_operands = 0 : i64, tpu.core_type = #tpu.core_type<tc>, window_params = [{transform_indices = @transform_0, window_bounds = array<i64: 128, 32>}, {pipeline_mode = #tpu.pipeline_mode<synchronous>, transform_indices = @transform_1, window_bounds = array<i64: 32, 128>}, {pipeline_mode = #tpu.pipeline_mode<synchronous>, transform_indices = @transform_2, window_bounds = array<i64: 1, 128>}, {transform_indices = @transform_3, window_bounds = array<i64: 128, 128>}]} {
    %c0 = arith.constant 0 : index
    %c0_0 = arith.constant 0 : index
    %0 = vector.load %arg1[%c0, %c0_0] : memref<128x32xf32, #tpu.memory_space<vmem>>, vector<128x32xf32>
    %c0_1 = arith.constant 0 : index
    %c0_2 = arith.constant 0 : index
    %1 = vector.load %arg2[%c0_1, %c0_2] : memref<32x128xf32, #tpu.memory_space<vmem>>, vector<32x128xf32>
    %cst = arith.constant dense<0.000000e+00> : vector<128x128xf32>
    %2 = tpu.matmul %0, %1, %cst {dimension_numbers = #tpu.dot_dimension_numbers<[1], [0], [0], [1], [0, 0, 1, 1], [], []>, precision = #tpu.contract_precision<fp32>} : vector<128x32xf32>, vector<32x128xf32>, vector<128x128xf32> -> vector<128x128xf32>
    %c0_3 = arith.constant 0 : index
    %c0_4 = arith.constant 0 : index
    %3 = vector.load %arg3[%c0_3, %c0_4] : memref<1x128xf32, #tpu.memory_space<vmem>>, vector<1x128xf32>
    %4 = vector.broadcast %3 : vector<1x128xf32> to vector<128x128xf32>
    %5 = arith.addf %2, %4 : vector<128x128xf32>
    %6 = math.cos %5 : vector<128x128xf32>
    %c0_5 = arith.constant 0 : index
    %c0_6 = arith.constant 0 : index
    %7 = vector.load %arg4[%c0_5, %c0_6] : memref<128x128xf32, #tpu.memory_space<vmem>>, vector<128x128xf32>
    tpu.vector_store %arg4[%c0_5, %c0_6], %6 {strides = array<i32>} : memref<128x128xf32, #tpu.memory_space<vmem>>, vector<128x128xf32>,
    return
  }
  func.func @transform_0(%arg0: i32) -> (i32, i32) {
    %c0_i32 = arith.constant 0 : i32
    %c0_i32_0 = arith.constant 0 : i32
    return %arg0, %c0_i32 : i32, i32
  }
  func.func @transform_1(%arg0: i32) -> (i32, i32) {
    %c0_i32 = arith.constant 0 : i32
    %c0_i32_0 = arith.constant 0 : i32
    %c0_i32_1 = arith.constant 0 : i32
    return %c0_i32, %c0_i32_0 : i32, i32
  }
  func.func @transform_2(%arg0: i32) -> (i32, i32) {
    %c0_i32 = arith.constant 0 : i32
    %c0_i32_0 = arith.constant 0 : i32
    %c0_i32_1 = arith.constant 0 : i32
    return %c0_i32, %c0_i32_0 : i32, i32
  }
  func.func @transform_3(%arg0: i32) -> (i32, i32) {
    %c0_i32 = arith.constant 0 : i32
    %c0_i32_0 = arith.constant 0 : i32
    return %arg0, %c0_i32 : i32, i32
  }
}

</mosaic_0001>

<llo_original>
// kernel: qnn_forward.1
$region0: #{qnn_forward.1}
  #allocation0 [shape = 'u32[]', space=smem, size = 0x4, offset = 0x4, fixed_abs, tag = 'smem constant byte address 0x4 - core index']
  #allocation1 [shape = 'u32[144,128]{1,0:T(1,128)}', space=vmem, size = 0x12000, scoped, tag = 'internal scratch']
  %s0 = inlined_call_operand.vmem [shape: f32[256,32], index: 0, kind: input, shape index: {}]
  %s1 = inlined_call_operand.vmem [shape: f32[32,128], index: 1, kind: input, shape index: {}]
  %s2 = inlined_call_operand.vmem [shape: f32[1,128], index: 2, kind: input, shape index: {}]
  %s3 = inlined_call_operand.vmem [shape: f32[256,128], index: 3, kind: output, shape index: {}]
  %s4 = sld [smem:[#allocation0]]
  $region45: #{qnn_forward.1} parent=0
    _
  %s6 = ssub.s32 1, %s4
  %s7 = scalar_select 0, %s6, %s4
  loop: start=0, step=1, limit=4
  $region2: #{qnn_forward.1} parent=0 // loop_pre_header
    _
  $region3: #{qnn_forward.1} parent=0 // loop_header
    %s9 = sphi 0, %s13
    %p10 = scmp.ge.s32.totalorder %s9, 4
    %s19 = sphi 0, %s21
    %s22 = sphi 0, %s19
    %s23 = sphi 0, %s22
    %s39 = sphi 0, %s23
    %s43 = sphi 0, %s43
    %s45 = sphi 0, %s43
    %s46 = sphi 0, %s45
    %s60 = sphi 0, %s46
    %s64 = sphi 0, %s64
    %s66 = sphi 0, %s64
    %s67 = sphi 0, %s66
    %s81 = sphi 0, %s67
    %s87 = sphi 0, %s89
    %s90 = sphi 0, %s87
    %s91 = sphi 0, %s90
    %s107 = sphi 0, %s91
  $region4: #{qnn_forward.1} parent=0 // loop_header_branch
    %12 = sbr.rel (%p10) target = $region8
  $region5: #{qnn_forward.1} parent=0 // loop_body
    %s14 = ssub.s32 %s9, 1
    %s15 = ssub.s32 %s9, 2
    %s16 = sadd.s32 %s9, 1
    %s17 = ssub.s32 %s9, %s16
    %p18 = scmp.eq.s32.totalorder %s17, 0
    %s20 = sadd.s32 %s19, 1
    %s21 = scalar_select %p18, %s19, %s20
    %p24 = pneg %p18
    %p25 = scmp.eq.s32.totalorder %s9, 1
    %p26 = por %p24, %p25
    %p27 = scmp.ne.s32.totalorder %s19, %s22
    %p28 = scmp.eq.s32.totalorder %s9, 0
    %p29 = por %p27, %p28
    %p30 = scmp.ne.s32.totalorder %s19, %s22
    %p31 = scmp.eq.s32.totalorder %s14, 1
    %p32 = por %p30, %p31
    %p33 = scmp.ne.s32.totalorder %s22, %s23
    %p34 = scmp.eq.s32.totalorder %s14, 0
    %p35 = por %p33, %p34
    %p36 = scmp.ne.s32.totalorder %s22, %s23
    %p37 = scmp.eq.s32.totalorder %s15, 1
    %p38 = por %p36, %p37
    %p40 = scmp.ne.s32.totalorder %s23, %s39
    %p41 = scmp.eq.s32.totalorder %s15, 0
    %p42 = por %p40, %p41
    %s44 = sadd.s32 %s43, 1
    %p47 = scmp.eq.s32.totalorder %s9, 1
    %p48 = scmp.ne.s32.totalorder %s43, %s45
    %p49 = scmp.eq.s32.totalorder %s9, 0
    %p50 = por %p48, %p49
    %p51 = scmp.ne.s32.totalorder %s43, %s45
    %p52 = scmp.eq.s32.totalorder %s14, 1
    %p53 = por %p51, %p52
    %p54 = scmp.ne.s32.totalorder %s45, %s46
    %p55 = scmp.eq.s32.totalorder %s14, 0
    %p56 = por %p54, %p55
    %p57 = scmp.ne.s32.totalorder %s45, %s46
    %p58 = scmp.eq.s32.totalorder %s15, 1
    %p59 = por %p57, %p58
    %p61 = scmp.ne.s32.totalorder %s46, %s60
    %p62 = scmp.eq.s32.totalorder %s15, 0
    %p63 = por %p61, %p62
    %s65 = sadd.s32 %s64, 1
    %p68 = scmp.eq.s32.totalorder %s9, 1
    %p69 = scmp.ne.s32.totalorder %s64, %s66
    %p70 = scmp.eq.s32.totalorder %s9, 0
    %p71 = por %p69, %p70
    %p72 = scmp.ne.s32.totalorder %s64, %s66
    %p73 = scmp.eq.s32.totalorder %s14, 1
    %p74 = por %p72, %p73
    %p75 = scmp.ne.s32.totalorder %s66, %s67
    %p76 = scmp.eq.s32.totalorder %s14, 0
    %p77 = por %p75, %p76
    %p78 = scmp.ne.s32.totalorder %s66, %s67
    %p79 = scmp.eq.s32.totalorder %s15, 1
    %p80 = por %p78, %p79
    %p82 = scmp.ne.s32.totalorder %s67, %s81
    %p83 = scmp.eq.s32.totalorder %s15, 0
    %p84 = por %p82, %p83
    %s85 = ssub.s32 %s9, %s16
    %p86 = scmp.eq.s32.totalorder %s85, 0
    %s88 = sadd.s32 %s87, 1
    %s89 = scalar_select %p86, %s87, %s88
    %p92 = pneg %p86
    %p93 = scmp.eq.s32.totalorder %s9, 1
    %p94 = por %p92, %p93
    %p95 = scmp.ne.s32.totalorder %s87, %s90
    %p96 = scmp.eq.s32.totalorder %s9, 0
    %p97 = por %p95, %p96
    %p98 = scmp.ne.s32.totalorder %s87, %s90
    %p99 = scmp.eq.s32.totalorder %s14, 1
    %p100 = por %p98, %p99
    %p101 = scmp.ne.s32.totalorder %s90, %s91
    %p102 = scmp.eq.s32.totalorder %s14, 0
    %p103 = por %p101, %p102
    %p104 = scmp.ne.s32.totalorder %s90, %s91
    %p105 = scmp.eq.s32.totalorder %s15, 1
    %p106 = por %p104, %p105
    %p108 = scmp.ne.s32.totalorder %s91, %s107
    %p109 = scmp.eq.s32.totalorder %s15, 0
    %p110 = por %p108, %p109
    %p111 = scmp.le.s32.totalorder 1, %s9
    %p112 = scmp.lt.s32.totalorder %s9, 3
    %p113 = pnand %p111, %p112
    %p114 = pneg %p113
    // Predicated region
    $region9: #{qnn_forward.1} parent=5 // pred_check
      _
    $region10: #{qnn_forward.1} parent=5 // pred_check_branch
      %116 = sbr.rel (%p113) target = $region12
    $region11: #{qnn_forward.1} parent=5 // pred_region
      %s117 = ssub.s32 %s9, 1
      // Predicated region
      $region13: #{qnn_forward.1} parent=11 // pred_check
        %p118 = pneg %p56
      $region14: #{qnn_forward.1} parent=11 // pred_check_branch
        %120 = sbr.rel (%p118) target = $region16
      $region15: #{qnn_forward.1} parent=11 // pred_region
        _
      $region16: #{qnn_forward.1} parent=11 // pred_fallthru
        _
      // Predicated region
      $region17: #{qnn_forward.1} parent=11 // pred_check
        %p121 = pneg %p77
      $region18: #{qnn_forward.1} parent=11 // pred_check_branch
        %123 = sbr.rel (%p121) target = $region20
      $region19: #{qnn_forward.1} parent=11 // pred_region
        _
      $region20: #{qnn_forward.1} parent=11 // pred_fallthru
        _
    $region12: #{qnn_forward.1} parent=5 // pred_fallthru
      _
    %p124 = scmp.lt.s32.totalorder %s9, 2
    // Predicated region
    $region21: #{qnn_forward.1} parent=5 // pred_check
      %p125 = pneg %p124
    $region22: #{qnn_forward.1} parent=5 // pred_check_branch
      %127 = sbr.rel (%p125) target = $region24
    $region23: #{qnn_forward.1} parent=5 // pred_region
      // Predicated region
      $region25: #{qnn_forward.1} parent=23 // pred_check
        %p128 = pneg %p29
      $region26: #{qnn_forward.1} parent=23 // pred_check_branch
        %130 = sbr.rel (%p128) target = $region28
      $region27: #{qnn_forward.1} parent=23 // pred_region
        %s131 = smul.u32 16, %s9
        %p132 = scmp.lt.s32.totalorder %s131, 31
        %s133 = scalar_select %p132, %s131, 31
        %s134 = smul.addr %s133, 8
        %s135 = scalar_lea.vmem %s0, %s134
        %s136 = smul.u32 16, %s9
      $region28: #{qnn_forward.1} parent=23 // pred_fallthru
        _
    $region24: #{qnn_forward.1} parent=5 // pred_fallthru
      _
    %p137 = scmp.le.s32.totalorder 1, %s9
    %p138 = scmp.lt.s32.totalorder %s9, 3
    %p139 = pnand %p137, %p138
    %p140 = pneg %p139
    // Predicated region
    $region29: #{qnn_forward.1} parent=5 // pred_check
      _
    $region30: #{qnn_forward.1} parent=5 // pred_check_branch
      %142 = sbr.rel (%p139) target = $region32
    $region31: #{qnn_forward.1} parent=5 // pred_region
      %s143 = ssub.s32 %s9, 1
      %s144 = smul.u32 16, %s14
      %p145 = scmp.lt.s32.totalorder %s144, 31
      %s146 = scalar_select %p145, %s144, 31
      %s147 = smul.addr %s146, 8
      %s148 = scalar_lea.vmem %s0, %s147
      %p149 = pneg %p35
      %p150 = pneg %p32
      %p151 = pneg %p56
      %p152 = pneg %p53
      %p153 = pneg %p77
      %p154 = pneg %p74
      %p155 = pneg %p103
      %p156 = pneg %p100
      %s157 = smul.u32 16, %s14
      %p158 = scmp.lt.s32.totalorder %s157, 31
      %s159 = scalar_select %p158, %s157, 31
      %s160 = smul.addr %s159, 8
      %s161 = scalar_lea.vmem %s3, %s160
      %s162 = smul.u32 16, %s14
      %p163 = scmp.lt.s32.totalorder %s162, 31
      %s164 = scalar_select %p163, %s162, 31
      %s165 = smul.addr %s164, 8
      %s166 = scalar_lea.vmem %s0, %s165
      %s167 = smul.u32 16, %s14
      %s168 = smul.u32 16, %s14
      %p169 = scmp.lt.s32.totalorder %s168, 31
      %s170 = scalar_select %p169, %s168, 31
      %s171 = smul.addr %s170, 8
      %s172 = scalar_lea.vmem %s3, %s171
      %s173 = smul.u32 16, %s14
      %v174 = vld [vmem:[%s166] sm:$0xff]
      %v175 = vld [vmem:[%s166 + $0x8] sm:$0xff]
      %v176 = vld [vmem:[%s166 + $0x10] sm:$0xff]
      %v177 = vld [vmem:[%s166 + $0x18] sm:$0xff]
      %v178 = vld [vmem:[%s166 + $0x20] sm:$0xff]
      %v179 = vld [vmem:[%s166 + $0x28] sm:$0xff]
      %v180 = vld [vmem:[%s166 + $0x30] sm:$0xff]
      %v181 = vld [vmem:[%s166 + $0x38] sm:$0xff]
      %v182 = vld [vmem:[%s166 + $0x40] sm:$0xff]
      %v183 = vld [vmem:[%s166 + $0x48] sm:$0xff]
      %v184 = vld [vmem:[%s166 + $0x50] sm:$0xff]
      %v185 = vld [vmem:[%s166 + $0x58] sm:$0xff]
      %v186 = vld [vmem:[%s166 + $0x60] sm:$0xff]
      %v187 = vld [vmem:[%s166 + $0x68] sm:$0xff]
      %v188 = vld [vmem:[%s166 + $0x70] sm:$0xff]
      %v189 = vld [vmem:[%s166 + $0x78] sm:$0xff]
      %v190 = vld [vmem:[%s1] sm:$0xff]
      %v191 = vld [vmem:[%s1 + $0x8] sm:$0xff]
      %v192 = vld [vmem:[%s1 + $0x10] sm:$0xff]
      %v193 = vld [vmem:[%s1 + $0x18] sm:$0xff]
      %v194 = vld [vmem:[%s2] sm:$0x1]
      %v196 = vlaneseq
      %v197 = vshrl.u32 %v196, 7
      %v198 = vsub.s32 0, %v197
      %v199 = vrot.slane %v194, %v198
      %vm201 = vcmask 261120
      %v203 = vsel %vm201, %v174, 0
      %v206 = vsel %vm201, %v175, 0
      %v209 = vsel %vm201, %v176, 0
      %v212 = vsel %vm201, %v177, 0
      %v215 = vsel %vm201, %v178, 0
      %v218 = vsel %vm201, %v179, 0
      %v221 = vsel %vm201, %v180, 0
      %v224 = vsel %vm201, %v181, 0
      %v227 = vsel %vm201, %v182, 0
      %v230 = vsel %vm201, %v183, 0
      %v233 = vsel %vm201, %v184, 0
      %v236 = vsel %vm201, %v185, 0
      %v239 = vsel %vm201, %v186, 0
      %v242 = vsel %vm201, %v187, 0
      %v245 = vsel %vm201, %v188, 0
      %v248 = vsel %vm201, %v189, 0
      %250 = vmatprep.subr.mxu0 0.0
      %251 = vmatpush1.msra.mxu0 0.0
      %252 = vmatprep.subr.mxu0 0.0
      %253 = vmatpush1.msra.mxu0 0.0
      %254 = vmatprep.subr.mxu0 0.0
      %255 = vmatpush1.msra.mxu0 0.0
      %256 = vmatprep.subr.mxu0 0.0
      %257 = vmatpush1.msra.mxu0 0.0
      %258 = vmatprep.subr.mxu0 0.0
      %259 = vmatpush1.msra.mxu0 0.0
      %260 = vmatprep.subr.mxu0 0.0
      %261 = vmatpush1.msra.mxu0 0.0
      %262 = vmatprep.subr.mxu0 0.0
      %263 = vmatpush1.msra.mxu0 0.0
      %264 = vmatprep.subr.mxu0 0.0
      %265 = vmatpush1.msra.mxu0 0.0
      %266 = vmatprep.subr.mxu0 0.0
      %267 = vmatpush1.msra.mxu0 0.0
      %268 = vmatprep.subr.mxu0 0.0
      %269 = vmatpush1.msra.mxu0 0.0
      %270 = vmatprep.subr.mxu0 0.0
      %271 = vmatpush1.msra.mxu0 0.0
      %272 = vmatprep.subr.mxu0 0.0
      %273 = vmatpush1.msra.mxu0 0.0
      %274 = vmatprep.subr.mxu0 0.0
      %v275 = vand.u32 %v193, 4294901760
      %276 = vmatpush1.msra.mxu0 %v275
      %277 = vmatprep.subr.mxu0 0.0
      %v278 = vand.u32 %v192, 4294901760
      %279 = vmatpush1.msra.mxu0 %v278
      %280 = vmatprep.subr.mxu0 0.0
      %v281 = vand.u32 %v191, 4294901760
      %282 = vmatpush1.msra.mxu0 %v281
      %283 = vmatprep.subr.mxu0 0.0
      %v284 = vand.u32 %v190, 4294901760
      %285 = vmatpush1.msra.mxu0 %v284
      %286 = vmatprep.subr.mxu0 0.0
      %287 = vmatpush2.msra.mxu0 0.0
      %288 = vmatprep.subr.mxu0 0.0
      %289 = vmatpush2.msra.mxu0 0.0
      %290 = vmatprep.subr.mxu0 0.0
      %291 = vmatpush2.msra.mxu0 0.0
      %292 = vmatprep.subr.mxu0 0.0
      %293 = vmatpush2.msra.mxu0 0.0
      %294 = vmatprep.subr.mxu0 0.0
      %295 = vmatpush2.msra.mxu0 0.0
      %296 = vmatprep.subr.mxu0 0.0
      %297 = vmatpush2.msra.mxu0 0.0
      %298 = vmatprep.subr.mxu0 0.0
      %299 = vmatpush2.msra.mxu0 0.0
      %300 = vmatprep.subr.mxu0 0.0
      %301 = vmatpush2.msra.mxu0 0.0
      %302 = vmatprep.subr.mxu0 0.0
      %303 = vmatpush2.msra.mxu0 0.0
      %304 = vmatprep.subr.mxu0 0.0
      %305 = vmatpush2.msra.mxu0 0.0
      %306 = vmatprep.subr.mxu0 0.0
      %307 = vmatpush2.msra.mxu0 0.0
      %308 = vmatprep.subr.mxu0 0.0
      %309 = vmatpush2.msra.mxu0 0.0
      %310 = vmatprep.subr.mxu0 0.0
      %311 = vmatpush2.msra.mxu0 0.0
      %312 = vmatprep.subr.mxu0 0.0
      %313 = vmatpush2.msra.mxu0 0.0
      %314 = vmatprep.subr.mxu0 0.0
      %315 = vmatpush2.msra.mxu0 0.0
      %316 = vmatprep.subr.mxu0 0.0
      %317 = vmatpush2.msra.mxu0 0.0
      %318 = vmatprep.mubr.f32.mxu0 0.0
      %v319 = vand.u32 %v203, 4294901760
      %v320 = vsub.f32 %v203, %v319
      %v321 = vand.u32 %v320, 4294901760
      %v322 = vsub.f32 %v320, %v321
      %v323 = vand.u32 %v322, 4294901760
      %324 = vmatmul.mubr.f32.gmra.mxu0 %v323
      %v325 = vpop.f32.mrf.mxu0
      %v326 = vadd.f32 %v199, %v325
      %v327 = vpop.f32.mrf.mxu0
      %328 = vmatprep.mubr.f32.mxu0 0.0
      %v329 = vand.u32 %v206, 4294901760
      %v330 = vsub.f32 %v206, %v329
      %v331 = vand.u32 %v330, 4294901760
      %v332 = vsub.f32 %v330, %v331
      %v333 = vand.u32 %v332, 4294901760
      %334 = vmatmul.mubr.f32.gmra.mxu0 %v333
      %v335 = vpop.f32.mrf.mxu0
      %v336 = vadd.f32 %v199, %v335
      %v337 = vpop.f32.mrf.mxu0
      %338 = vmatprep.mubr.f32.mxu0 0.0
      %v339 = vand.u32 %v209, 4294901760
      %v340 = vsub.f32 %v209, %v339
      %v341 = vand.u32 %v340, 4294901760
      %v342 = vsub.f32 %v340, %v341
      %v343 = vand.u32 %v342, 4294901760
      %344 = vmatmul.mubr.f32.gmra.mxu0 %v343
      %v345 = vpop.f32.mrf.mxu0
      %v346 = vadd.f32 %v199, %v345
      %v347 = vpop.f32.mrf.mxu0
      %348 = vmatprep.mubr.f32.mxu0 0.0
      %v349 = vand.u32 %v212, 4294901760
      %v350 = vsub.f32 %v212, %v349
      %v351 = vand.u32 %v350, 4294901760
      %v352 = vsub.f32 %v350, %v351
      %v353 = vand.u32 %v352, 4294901760
      %354 = vmatmul.mubr.f32.gmra.mxu0 %v353
      %v355 = vpop.f32.mrf.mxu0
      %v356 = vadd.f32 %v199, %v355
      %v357 = vpop.f32.mrf.mxu0
      %358 = vmatprep.mubr.f32.mxu0 0.0
      %v359 = vand.u32 %v215, 4294901760
      %v360 = vsub.f32 %v215, %v359
      %v361 = vand.u32 %v360, 4294901760
      %v362 = vsub.f32 %v360, %v361
      %v363 = vand.u32 %v362, 4294901760
      %364 = vmatmul.mubr.f32.gmra.mxu0 %v363
      %v365 = vpop.f32.mrf.mxu0
      %v366 = vadd.f32 %v199, %v365
      %v367 = vpop.f32.mrf.mxu0
      %368 = vmatprep.mubr.f32.mxu0 0.0
      %v369 = vand.u32 %v218, 4294901760
      %v370 = vsub.f32 %v218, %v369
      %v371 = vand.u32 %v370, 4294901760
      %v372 = vsub.f32 %v370, %v371
      %v373 = vand.u32 %v372, 4294901760
      %374 = vmatmul.mubr.f32.gmra.mxu0 %v373
      %v375 = vpop.f32.mrf.mxu0
      %v376 = vadd.f32 %v199, %v375
      %v377 = vpop.f32.mrf.mxu0
      %378 = vmatprep.mubr.f32.mxu0 0.0
      %v379 = vand.u32 %v221, 4294901760
      %v380 = vsub.f32 %v221, %v379
      %v381 = vand.u32 %v380, 4294901760
      %v382 = vsub.f32 %v380, %v381
      %v383 = vand.u32 %v382, 4294901760
      %384 = vmatmul.mubr.f32.gmra.mxu0 %v383
      %v385 = vpop.f32.mrf.mxu0
      %v386 = vadd.f32 %v199, %v385
      %v387 = vpop.f32.mrf.mxu0
      %388 = vmatprep.mubr.f32.mxu0 0.0
      %v389 = vand.u32 %v224, 4294901760
      %v390 = vsub.f32 %v224, %v389
      %v391 = vand.u32 %v390, 4294901760
      %v392 = vsub.f32 %v390, %v391
      %v393 = vand.u32 %v392, 4294901760
      %394 = vmatmul.mubr.f32.gmra.mxu0 %v393
      %v395 = vpop.f32.mrf.mxu0
      %v396 = vadd.f32 %v199, %v395
      %v397 = vpop.f32.mrf.mxu0
      %398 = vmatprep.mubr.f32.mxu0 0.0
      %v399 = vand.u32 %v227, 4294901760
      %v400 = vsub.f32 %v227, %v399
      %v401 = vand.u32 %v400, 4294901760
      %v402 = vsub.f32 %v400, %v401
      %v403 = vand.u32 %v402, 4294901760
      %404 = vmatmul.mubr.f32.gmra.mxu0 %v403
      %v405 = vpop.f32.mrf.mxu0
      %v406 = vadd.f32 %v199, %v405
      %v407 = vpop.f32.mrf.mxu0
      %408 = vmatprep.mubr.f32.mxu0 0.0
      %v409 = vand.u32 %v230, 4294901760
      %v410 = vsub.f32 %v230, %v409
      %v411 = vand.u32 %v410, 4294901760
      %v412 = vsub.f32 %v410, %v411
      %v413 = vand.u32 %v412, 4294901760
      %414 = vmatmul.mubr.f32.gmra.mxu0 %v413
      %v415 = vpop.f32.mrf.mxu0
      %v416 = vadd.f32 %v199, %v415
      %v417 = vpop.f32.mrf.mxu0
      %418 = vmatprep.mubr.f32.mxu0 0.0
      %v419 = vand.u32 %v233, 4294901760
      %v420 = vsub.f32 %v233, %v419
      %v421 = vand.u32 %v420, 4294901760
      %v422 = vsub.f32 %v420, %v421
      %v423 = vand.u32 %v422, 4294901760
      %424 = vmatmul.mubr.f32.gmra.mxu0 %v423
      %v425 = vpop.f32.mrf.mxu0
      %v426 = vadd.f32 %v199, %v425
      %v427 = vpop.f32.mrf.mxu0
      %428 = vmatprep.mubr.f32.mxu0 0.0
      %v429 = vand.u32 %v236, 4294901760
      %v430 = vsub.f32 %v236, %v429
      %v431 = vand.u32 %v430, 4294901760
      %v432 = vsub.f32 %v430, %v431
      %v433 = vand.u32 %v432, 4294901760
      %434 = vmatmul.mubr.f32.gmra.mxu0 %v433
      %v435 = vpop.f32.mrf.mxu0
      %v436 = vadd.f32 %v199, %v435
      %v437 = vpop.f32.mrf.mxu0
      %438 = vmatprep.mubr.f32.mxu0 0.0
      %v439 = vand.u32 %v239, 4294901760
      %v440 = vsub.f32 %v239, %v439
      %v441 = vand.u32 %v440, 4294901760
      %v442 = vsub.f32 %v440, %v441
      %v443 = vand.u32 %v442, 4294901760
      %444 = vmatmul.mubr.f32.gmra.mxu0 %v443
      %v445 = vpop.f32.mrf.mxu0
      %v446 = vadd.f32 %v199, %v445
      %v447 = vpop.f32.mrf.mxu0
      %448 = vmatprep.mubr.f32.mxu0 0.0
      %v449 = vand.u32 %v242, 4294901760
      %v450 = vsub.f32 %v242, %v449
      %v451 = vand.u32 %v450, 4294901760
      %v452 = vsub.f32 %v450, %v451
      %v453 = vand.u32 %v452, 4294901760
      %454 = vmatmul.mubr.f32.gmra.mxu0 %v453
      %v455 = vpop.f32.mrf.mxu0
      %v456 = vadd.f32 %v199, %v455
      %v457 = vpop.f32.mrf.mxu0
      %458 = vmatprep.mubr.f32.mxu0 0.0
      %v459 = vand.u32 %v245, 4294901760
      %v460 = vsub.f32 %v245, %v459
      %v461 = vand.u32 %v460, 4294901760
      %v462 = vsub.f32 %v460, %v461
      %v463 = vand.u32 %v462, 4294901760
      %464 = vmatmul.mubr.f32.gmra.mxu0 %v463
      %v465 = vpop.f32.mrf.mxu0
      %v466 = vadd.f32 %v199, %v465
      %v467 = vpop.f32.mrf.mxu0
      %468 = vmatprep.mubr.f32.mxu0 0.0
      %v469 = vand.u32 %v248, 4294901760
      %v470 = vsub.f32 %v248, %v469
      %v471 = vand.u32 %v470, 4294901760
      %v472 = vsub.f32 %v470, %v471
      %v473 = vand.u32 %v472, 4294901760
      %474 = vmatmul.mubr.f32.gmra.mxu0 %v473
      %v475 = vpop.f32.mrf.mxu0
      %v476 = vadd.f32 %v199, %v475
      %v477 = vpop.f32.mrf.mxu0
      %478 = vdwg.mxu0
      %479 = vmatprep.subr.mxu0 0.0
      %480 = vmatpush1.msra.mxu0 0.0
      %481 = vmatprep.subr.mxu0 0.0
      %482 = vmatpush1.msra.mxu0 0.0
      %483 = vmatprep.subr.mxu0 0.0
      %484 = vmatpush1.msra.mxu0 0.0
      %485 = vmatprep.subr.mxu0 0.0
      %486 = vmatpush1.msra.mxu0 0.0
      %487 = vmatprep.subr.mxu0 0.0
      %488 = vmatpush1.msra.mxu0 0.0
      %489 = vmatprep.subr.mxu0 0.0
      %490 = vmatpush1.msra.mxu0 0.0
      %491 = vmatprep.subr.mxu0 0.0
      %492 = vmatpush1.msra.mxu0 0.0
      %493 = vmatprep.subr.mxu0 0.0
      %494 = vmatpush1.msra.mxu0 0.0
      %495 = vmatprep.subr.mxu0 0.0
      %496 = vmatpush1.msra.mxu0 0.0
      %497 = vmatprep.subr.mxu0 0.0
      %498 = vmatpush1.msra.mxu0 0.0
      %499 = vmatprep.subr.mxu0 0.0
      %500 = vmatpush1.msra.mxu0 0.0
      %501 = vmatprep.subr.mxu0 0.0
      %502 = vmatpush1.msra.mxu0 0.0
      %503 = vmatprep.subr.mxu0 0.0
      %v504 = vand.u32 %v193, 4294901760
      %v505 = vsub.f32 %v193, %v504
      %v506 = vand.u32 %v505, 4294901760
      %v507 = vsub.f32 %v505, %v506
      %v508 = vand.u32 %v507, 4294901760
      %509 = vmatpush1.msra.mxu0 %v508
      %510 = vmatprep.subr.mxu0 0.0
      %v511 = vand.u32 %v192, 4294901760
      %v512 = vsub.f32 %v192, %v511
      %v513 = vand.u32 %v512, 4294901760
      %v514 = vsub.f32 %v512, %v513
      %v515 = vand.u32 %v514, 4294901760
      %516 = vmatpush1.msra.mxu0 %v515
      %517 = vmatprep.subr.mxu0 0.0
      %v518 = vand.u32 %v191, 4294901760
      %v519 = vsub.f32 %v191, %v518
      %v520 = vand.u32 %v519, 4294901760
      %v521 = vsub.f32 %v519, %v520
      %v522 = vand.u32 %v521, 4294901760
      %523 = vmatpush1.msra.mxu0 %v522
      %524 = vmatprep.subr.mxu0 0.0
      %v525 = vand.u32 %v190, 4294901760
      %v526 = vsub.f32 %v190, %v525
      %v527 = vand.u32 %v526, 4294901760
      %v528 = vsub.f32 %v526, %v527
      %v529 = vand.u32 %v528, 4294901760
      %530 = vmatpush1.msra.mxu0 %v529
      %531 = vmatprep.subr.mxu0 0.0
      %532 = vmatpush2.msra.mxu0 0.0
      %533 = vmatprep.subr.mxu0 0.0
      %534 = vmatpush2.msra.mxu0 0.0
      %535 = vmatprep.subr.mxu0 0.0
      %536 = vmatpush2.msra.mxu0 0.0
      %537 = vmatprep.subr.mxu0 0.0
      %538 = vmatpush2.msra.mxu0 0.0
      %539 = vmatprep.subr.mxu0 0.0
      %540 = vmatpush2.msra.mxu0 0.0
      %541 = vmatprep.subr.mxu0 0.0
      %542 = vmatpush2.msra.mxu0 0.0
      %543 = vmatprep.subr.mxu0 0.0
      %544 = vmatpush2.msra.mxu0 0.0
      %545 = vmatprep.subr.mxu0 0.0
      %546 = vmatpush2.msra.mxu0 0.0
      %547 = vmatprep.subr.mxu0 0.0
      %548 = vmatpush2.msra.mxu0 0.0
      %549 = vmatprep.subr.mxu0 0.0
      %550 = vmatpush2.msra.mxu0 0.0
      %551 = vmatprep.subr.mxu0 0.0
      %552 = vmatpush2.msra.mxu0 0.0
      %553 = vmatprep.subr.mxu0 0.0
      %554 = vmatpush2.msra.mxu0 0.0
      %555 = vmatprep.subr.mxu0 0.0
      %556 = vmatpush2.msra.mxu0 0.0
      %557 = vmatprep.subr.mxu0 0.0
      %558 = vmatpush2.msra.mxu0 0.0
      %559 = vmatprep.subr.mxu0 0.0
      %560 = vmatpush2.msra.mxu0 0.0
      %561 = vmatprep.subr.mxu0 0.0
      %562 = vmatpush2.msra.mxu0 0.0
      %563 = vmatprep.mubr.f32.mxu0 0.0
      %v564 = vand.u32 %v203, 4294901760
      %565 = vmatmul.mubr.f32.gmra.mxu0 %v564
      %v566 = vpop.f32.mrf.mxu0
      %v567 = vadd.f32 %v326, %v566
      %v568 = vpop.f32.mrf.mxu0
      %569 = vmatprep.mubr.f32.mxu0 0.0
      %v570 = vand.u32 %v206, 4294901760
      %571 = vmatmul.mubr.f32.gmra.mxu0 %v570
      %v572 = vpop.f32.mrf.mxu0
      %v573 = vadd.f32 %v336, %v572
      %v574 = vpop.f32.mrf.mxu0
      %575 = vmatprep.mubr.f32.mxu0 0.0
      %v576 = vand.u32 %v209, 4294901760
      %577 = vmatmul.mubr.f32.gmra.mxu0 %v576
      %v578 = vpop.f32.mrf.mxu0
      %v579 = vadd.f32 %v346, %v578
      %v580 = vpop.f32.mrf.mxu0
      %581 = vmatprep.mubr.f32.mxu0 0.0
      %v582 = vand.u32 %v212, 4294901760
      %583 = vmatmul.mubr.f32.gmra.mxu0 %v582
      %v584 = vpop.f32.mrf.mxu0
      %v585 = vadd.f32 %v356, %v584
      %v586 = vpop.f32.mrf.mxu0
      %587 = vmatprep.mubr.f32.mxu0 0.0
      %v588 = vand.u32 %v215, 4294901760
      %589 = vmatmul.mubr.f32.gmra.mxu0 %v588
      %v590 = vpop.f32.mrf.mxu0
      %v591 = vadd.f32 %v366, %v590
      %v592 = vpop.f32.mrf.mxu0
      %593 = vmatprep.mubr.f32.mxu0 0.0
      %v594 = vand.u32 %v218, 4294901760
      %595 = vmatmul.mubr.f32.gmra.mxu0 %v594
      %v596 = vpop.f32.mrf.mxu0
      %v597 = vadd.f32 %v376, %v596
      %v598 = vpop.f32.mrf.mxu0
      %599 = vmatprep.mubr.f32.mxu0 0.0
      %v600 = vand.u32 %v221, 4294901760
      %601 = vmatmul.mubr.f32.gmra.mxu0 %v600
      %v602 = vpop.f32.mrf.mxu0
      %v603 = vadd.f32 %v386, %v602
      %v604 = vpop.f32.mrf.mxu0
      %605 = vmatprep.mubr.f32.mxu0 0.0
      %v606 = vand.u32 %v224, 4294901760
      %607 = vmatmul.mubr.f32.gmra.mxu0 %v606
      %v608 = vpop.f32.mrf.mxu0
      %v609 = vadd.f32 %v396, %v608
      %v610 = vpop.f32.mrf.mxu0
      %611 = vmatprep.mubr.f32.mxu0 0.0
      %v612 = vand.u32 %v227, 4294901760
      %613 = vmatmul.mubr.f32.gmra.mxu0 %v612
      %v614 = vpop.f32.mrf.mxu0
      %v615 = vadd.f32 %v406, %v614
      %v616 = vpop.f32.mrf.mxu0
      %617 = vmatprep.mubr.f32.mxu0 0.0
      %v618 = vand.u32 %v230, 4294901760
      %619 = vmatmul.mubr.f32.gmra.mxu0 %v618
      %v620 = vpop.f32.mrf.mxu0
      %v621 = vadd.f32 %v416, %v620
      %v622 = vpop.f32.mrf.mxu0
      %623 = vmatprep.mubr.f32.mxu0 0.0
      %v624 = vand.u32 %v233, 4294901760
      %625 = vmatmul.mubr.f32.gmra.mxu0 %v624
      %v626 = vpop.f32.mrf.mxu0
      %v627 = vadd.f32 %v426, %v626
      %v628 = vpop.f32.mrf.mxu0
      %629 = vmatprep.mubr.f32.mxu0 0.0
      %v630 = vand.u32 %v236, 4294901760
      %631 = vmatmul.mubr.f32.gmra.mxu0 %v630
      %v632 = vpop.f32.mrf.mxu0
      %v633 = vadd.f32 %v436, %v632
      %v634 = vpop.f32.mrf.mxu0
      %635 = vmatprep.mubr.f32.mxu0 0.0
      %v636 = vand.u32 %v239, 4294901760
      %637 = vmatmul.mubr.f32.gmra.mxu0 %v636
      %v638 = vpop.f32.mrf.mxu0
      %v639 = vadd.f32 %v446, %v638
      %v640 = vpop.f32.mrf.mxu0
      %641 = vmatprep.mubr.f32.mxu0 0.0
      %v642 = vand.u32 %v242, 4294901760
      %643 = vmatmul.mubr.f32.gmra.mxu0 %v642
      %v644 = vpop.f32.mrf.mxu0
      %v645 = vadd.f32 %v456, %v644
      %v646 = vpop.f32.mrf.mxu0
      %647 = vmatprep.mubr.f32.mxu0 0.0
      %v648 = vand.u32 %v245, 4294901760
      %649 = vmatmul.mubr.f32.gmra.mxu0 %v648
      %v650 = vpop.f32.mrf.mxu0
      %v651 = vadd.f32 %v466, %v650
      %v652 = vpop.f32.mrf.mxu0
      %653 = vmatprep.mubr.f32.mxu0 0.0
      %v654 = vand.u32 %v248, 4294901760
      %655 = vmatmul.mubr.f32.gmra.mxu0 %v654
      %v656 = vpop.f32.mrf.mxu0
      %v657 = vadd.f32 %v476, %v656
      %v658 = vpop.f32.mrf.mxu0
      %659 = vdwg.mxu0
      %660 = vmatprep.subr.mxu0 0.0
      %661 = vmatpush1.msra.mxu0 0.0
      %662 = vmatprep.subr.mxu0 0.0
      %663 = vmatpush1.msra.mxu0 0.0
      %664 = vmatprep.subr.mxu0 0.0
      %665 = vmatpush1.msra.mxu0 0.0
      %666 = vmatprep.subr.mxu0 0.0
      %667 = vmatpush1.msra.mxu0 0.0
      %668 = vmatprep.subr.mxu0 0.0
      %669 = vmatpush1.msra.mxu0 0.0
      %670 = vmatprep.subr.mxu0 0.0
      %671 = vmatpush1.msra.mxu0 0.0
      %672 = vmatprep.subr.mxu0 0.0
      %673 = vmatpush1.msra.mxu0 0.0
      %674 = vmatprep.subr.mxu0 0.0
      %675 = vmatpush1.msra.mxu0 0.0
      %676 = vmatprep.subr.mxu0 0.0
      %677 = vmatpush1.msra.mxu0 0.0
      %678 = vmatprep.subr.mxu0 0.0
      %679 = vmatpush1.msra.mxu0 0.0
      %680 = vmatprep.subr.mxu0 0.0
      %681 = vmatpush1.msra.mxu0 0.0
      %682 = vmatprep.subr.mxu0 0.0
      %683 = vmatpush1.msra.mxu0 0.0
      %684 = vmatprep.subr.mxu0 0.0
      %v685 = vand.u32 %v193, 4294901760
      %v686 = vsub.f32 %v193, %v685
      %687 = vmatpush1.msra.mxu0 %v686
      %688 = vmatprep.subr.mxu0 0.0
      %v689 = vand.u32 %v192, 4294901760
      %v690 = vsub.f32 %v192, %v689
      %691 = vmatpush1.msra.mxu0 %v690
      %692 = vmatprep.subr.mxu0 0.0
      %v693 = vand.u32 %v191, 4294901760
      %v694 = vsub.f32 %v191, %v693
      %695 = vmatpush1.msra.mxu0 %v694
      %696 = vmatprep.subr.mxu0 0.0
      %v697 = vand.u32 %v190, 4294901760
      %v698 = vsub.f32 %v190, %v697
      %699 = vmatpush1.msra.mxu0 %v698
      %700 = vmatprep.subr.mxu0 0.0
      %701 = vmatpush2.msra.mxu0 0.0
      %702 = vmatprep.subr.mxu0 0.0
      %703 = vmatpush2.msra.mxu0 0.0
      %704 = vmatprep.subr.mxu0 0.0
      %705 = vmatpush2.msra.mxu0 0.0
      %706 = vmatprep.subr.mxu0 0.0
      %707 = vmatpush2.msra.mxu0 0.0
      %708 = vmatprep.subr.mxu0 0.0
      %709 = vmatpush2.msra.mxu0 0.0
      %710 = vmatprep.subr.mxu0 0.0
      %711 = vmatpush2.msra.mxu0 0.0
      %712 = vmatprep.subr.mxu0 0.0
      %713 = vmatpush2.msra.mxu0 0.0
      %714 = vmatprep.subr.mxu0 0.0
      %715 = vmatpush2.msra.mxu0 0.0
      %716 = vmatprep.subr.mxu0 0.0
      %717 = vmatpush2.msra.mxu0 0.0
      %718 = vmatprep.subr.mxu0 0.0
      %719 = vmatpush2.msra.mxu0 0.0
      %720 = vmatprep.subr.mxu0 0.0
      %721 = vmatpush2.msra.mxu0 0.0
      %722 = vmatprep.subr.mxu0 0.0
      %723 = vmatpush2.msra.mxu0 0.0
      %724 = vmatprep.subr.mxu0 0.0
      %725 = vmatpush2.msra.mxu0 0.0
      %726 = vmatprep.subr.mxu0 0.0
      %727 = vmatpush2.msra.mxu0 0.0
      %728 = vmatprep.subr.mxu0 0.0
      %729 = vmatpush2.msra.mxu0 0.0
      %730 = vmatprep.subr.mxu0 0.0
      %731 = vmatpush2.msra.mxu0 0.0
      %732 = vmatprep.mubr.f32.mxu0 0.0
      %v733 = vand.u32 %v203, 4294901760
      %v734 = vsub.f32 %v203, %v733
      %735 = vmatmul.mubr.f32.gmra.mxu0 %v734
      %v736 = vpop.f32.mrf.mxu0
      %v737 = vadd.f32 %v567, %v736
      %v738 = vpop.f32.mrf.mxu0
      %739 = vmatprep.mubr.f32.mxu0 0.0
      %v740 = vand.u32 %v206, 4294901760
      %v741 = vsub.f32 %v206, %v740
      %742 = vmatmul.mubr.f32.gmra.mxu0 %v741
      %v743 = vpop.f32.mrf.mxu0
      %v744 = vadd.f32 %v573, %v743
      %v745 = vpop.f32.mrf.mxu0
      %746 = vmatprep.mubr.f32.mxu0 0.0
      %v747 = vand.u32 %v209, 4294901760
      %v748 = vsub.f32 %v209, %v747
      %749 = vmatmul.mubr.f32.gmra.mxu0 %v748
      %v750 = vpop.f32.mrf.mxu0
      %v751 = vadd.f32 %v579, %v750
      %v752 = vpop.f32.mrf.mxu0
      %753 = vmatprep.mubr.f32.mxu0 0.0
      %v754 = vand.u32 %v212, 4294901760
      %v755 = vsub.f32 %v212, %v754
      %756 = vmatmul.mubr.f32.gmra.mxu0 %v755
      %v757 = vpop.f32.mrf.mxu0
      %v758 = vadd.f32 %v585, %v757
      %v759 = vpop.f32.mrf.mxu0
      %760 = vmatprep.mubr.f32.mxu0 0.0
      %v761 = vand.u32 %v215, 4294901760
      %v762 = vsub.f32 %v215, %v761
      %763 = vmatmul.mubr.f32.gmra.mxu0 %v762
      %v764 = vpop.f32.mrf.mxu0
      %v765 = vadd.f32 %v591, %v764
      %v766 = vpop.f32.mrf.mxu0
      %767 = vmatprep.mubr.f32.mxu0 0.0
      %v768 = vand.u32 %v218, 4294901760
      %v769 = vsub.f32 %v218, %v768
      %770 = vmatmul.mubr.f32.gmra.mxu0 %v769
      %v771 = vpop.f32.mrf.mxu0
      %v772 = vadd.f32 %v597, %v771
      %v773 = vpop.f32.mrf.mxu0
      %774 = vmatprep.mubr.f32.mxu0 0.0
      %v775 = vand.u32 %v221, 4294901760
      %v776 = vsub.f32 %v221, %v775
      %777 = vmatmul.mubr.f32.gmra.mxu0 %v776
      %v778 = vpop.f32.mrf.mxu0
      %v779 = vadd.f32 %v603, %v778
      %v780 = vpop.f32.mrf.mxu0
      %781 = vmatprep.mubr.f32.mxu0 0.0
      %v782 = vand.u32 %v224, 4294901760
      %v783 = vsub.f32 %v224, %v782
      %784 = vmatmul.mubr.f32.gmra.mxu0 %v783
      %v785 = vpop.f32.mrf.mxu0
      %v786 = vadd.f32 %v609, %v785
      %v787 = vpop.f32.mrf.mxu0
      %788 = vmatprep.mubr.f32.mxu0 0.0
      %v789 = vand.u32 %v227, 4294901760
      %v790 = vsub.f32 %v227, %v789
      %791 = vmatmul.mubr.f32.gmra.mxu0 %v790
      %v792 = vpop.f32.mrf.mxu0
      %v793 = vadd.f32 %v615, %v792
      %v794 = vpop.f32.mrf.mxu0
      %795 = vmatprep.mubr.f32.mxu0 0.0
      %v796 = vand.u32 %v230, 4294901760
      %v797 = vsub.f32 %v230, %v796
      %798 = vmatmul.mubr.f32.gmra.mxu0 %v797
      %v799 = vpop.f32.mrf.mxu0
      %v800 = vadd.f32 %v621, %v799
      %v801 = vpop.f32.mrf.mxu0
      %802 = vmatprep.mubr.f32.mxu0 0.0
      %v803 = vand.u32 %v233, 4294901760
      %v804 = vsub.f32 %v233, %v803
      %805 = vmatmul.mubr.f32.gmra.mxu0 %v804
      %v806 = vpop.f32.mrf.mxu0
      %v807 = vadd.f32 %v627, %v806
      %v808 = vpop.f32.mrf.mxu0
      %809 = vmatprep.mubr.f32.mxu0 0.0
      %v810 = vand.u32 %v236, 4294901760
      %v811 = vsub.f32 %v236, %v810
      %812 = vmatmul.mubr.f32.gmra.mxu0 %v811
      %v813 = vpop.f32.mrf.mxu0
      %v814 = vadd.f32 %v633, %v813
      %v815 = vpop.f32.mrf.mxu0
      %816 = vmatprep.mubr.f32.mxu0 0.0
      %v817 = vand.u32 %v239, 4294901760
      %v818 = vsub.f32 %v239, %v817
      %819 = vmatmul.mubr.f32.gmra.mxu0 %v818
      %v820 = vpop.f32.mrf.mxu0
      %v821 = vadd.f32 %v639, %v820
      %v822 = vpop.f32.mrf.mxu0
      %823 = vmatprep.mubr.f32.mxu0 0.0
      %v824 = vand.u32 %v242, 4294901760
      %v825 = vsub.f32 %v242, %v824
      %826 = vmatmul.mubr.f32.gmra.mxu0 %v825
      %v827 = vpop.f32.mrf.mxu0
      %v828 = vadd.f32 %v645, %v827
      %v829 = vpop.f32.mrf.mxu0
      %830 = vmatprep.mubr.f32.mxu0 0.0
      %v831 = vand.u32 %v245, 4294901760
      %v832 = vsub.f32 %v245, %v831
      %833 = vmatmul.mubr.f32.gmra.mxu0 %v832
      %v834 = vpop.f32.mrf.mxu0
      %v835 = vadd.f32 %v651, %v834
      %v836 = vpop.f32.mrf.mxu0
      %837 = vmatprep.mubr.f32.mxu0 0.0
      %v838 = vand.u32 %v248, 4294901760
      %v839 = vsub.f32 %v248, %v838
      %840 = vmatmul.mubr.f32.gmra.mxu0 %v839
      %v841 = vpop.f32.mrf.mxu0
      %v842 = vadd.f32 %v657, %v841
      %v843 = vpop.f32.mrf.mxu0
      %844 = vdwg.mxu0
      %845 = vmatprep.subr.mxu0 0.0
      %846 = vmatpush1.msra.mxu0 0.0
      %847 = vmatprep.subr.mxu0 0.0
      %848 = vmatpush1.msra.mxu0 0.0
      %849 = vmatprep.subr.mxu0 0.0
      %850 = vmatpush1.msra.mxu0 0.0
      %851 = vmatprep.subr.mxu0 0.0
      %852 = vmatpush1.msra.mxu0 0.0
      %853 = vmatprep.subr.mxu0 0.0
      %854 = vmatpush1.msra.mxu0 0.0
      %855 = vmatprep.subr.mxu0 0.0
      %856 = vmatpush1.msra.mxu0 0.0
      %857 = vmatprep.subr.mxu0 0.0
      %858 = vmatpush1.msra.mxu0 0.0
      %859 = vmatprep.subr.mxu0 0.0
      %860 = vmatpush1.msra.mxu0 0.0
      %861 = vmatprep.subr.mxu0 0.0
      %862 = vmatpush1.msra.mxu0 0.0
      %863 = vmatprep.subr.mxu0 0.0
      %864 = vmatpush1.msra.mxu0 0.0
      %865 = vmatprep.subr.mxu0 0.0
      %866 = vmatpush1.msra.mxu0 0.0
      %867 = vmatprep.subr.mxu0 0.0
      %868 = vmatpush1.msra.mxu0 0.0
      %869 = vmatprep.subr.mxu0 0.0
      %v870 = vand.u32 %v193, 4294901760
      %871 = vmatpush1.msra.mxu0 %v870
      %872 = vmatprep.subr.mxu0 0.0
      %v873 = vand.u32 %v192, 4294901760
      %874 = vmatpush1.msra.mxu0 %v873
      %875 = vmatprep.subr.mxu0 0.0
      %v876 = vand.u32 %v191, 4294901760
      %877 = vmatpush1.msra.mxu0 %v876
      %878 = vmatprep.subr.mxu0 0.0
      %v879 = vand.u32 %v190, 4294901760
      %880 = vmatpush1.msra.mxu0 %v879
      %881 = vmatprep.subr.mxu0 0.0
      %882 = vmatpush2.msra.mxu0 0.0
      %883 = vmatprep.subr.mxu0 0.0
      %884 = vmatpush2.msra.mxu0 0.0
      %885 = vmatprep.subr.mxu0 0.0
      %886 = vmatpush2.msra.mxu0 0.0
      %887 = vmatprep.subr.mxu0 0.0
      %888 = vmatpush2.msra.mxu0 0.0
      %889 = vmatprep.subr.mxu0 0.0
      %890 = vmatpush2.msra.mxu0 0.0
      %891 = vmatprep.subr.mxu0 0.0
      %892 = vmatpush2.msra.mxu0 0.0
      %893 = vmatprep.subr.mxu0 0.0
      %894 = vmatpush2.msra.mxu0 0.0
      %895 = vmatprep.subr.mxu0 0.0
      %896 = vmatpush2.msra.mxu0 0.0
      %897 = vmatprep.subr.mxu0 0.0
      %898 = vmatpush2.msra.mxu0 0.0
      %899 = vmatprep.subr.mxu0 0.0
      %900 = vmatpush2.msra.mxu0 0.0
      %901 = vmatprep.subr.mxu0 0.0
      %902 = vmatpush2.msra.mxu0 0.0
      %903 = vmatprep.subr.mxu0 0.0
      %904 = vmatpush2.msra.mxu0 0.0
      %905 = vmatprep.subr.mxu0 0.0
      %906 = vmatpush2.msra.mxu0 0.0
      %907 = vmatprep.subr.mxu0 0.0
      %908 = vmatpush2.msra.mxu0 0.0
      %909 = vmatprep.subr.mxu0 0.0
      %910 = vmatpush2.msra.mxu0 0.0
      %911 = vmatprep.subr.mxu0 0.0
      %912 = vmatpush2.msra.mxu0 0.0
      %913 = vmatprep.mubr.f32.mxu0 0.0
      %v914 = vand.u32 %v203, 4294901760
      %v915 = vsub.f32 %v203, %v914
      %v916 = vand.u32 %v915, 4294901760
      %917 = vmatmul.mubr.f32.gmra.mxu0 %v916
      %v918 = vpop.f32.mrf.mxu0
      %v919 = vadd.f32 %v737, %v918
      %v920 = vpop.f32.mrf.mxu0
      %921 = vmatprep.mubr.f32.mxu0 0.0
      %v922 = vand.u32 %v206, 4294901760
      %v923 = vsub.f32 %v206, %v922
      %v924 = vand.u32 %v923, 4294901760
      %925 = vmatmul.mubr.f32.gmra.mxu0 %v924
      %v926 = vpop.f32.mrf.mxu0
      %v927 = vadd.f32 %v744, %v926
      %v928 = vpop.f32.mrf.mxu0
      %929 = vmatprep.mubr.f32.mxu0 0.0
      %v930 = vand.u32 %v209, 4294901760
      %v931 = vsub.f32 %v209, %v930
      %v932 = vand.u32 %v931, 4294901760
      %933 = vmatmul.mubr.f32.gmra.mxu0 %v932
      %v934 = vpop.f32.mrf.mxu0
      %v935 = vadd.f32 %v751, %v934
      %v936 = vpop.f32.mrf.mxu0
      %937 = vmatprep.mubr.f32.mxu0 0.0
      %v938 = vand.u32 %v212, 4294901760
      %v939 = vsub.f32 %v212, %v938
      %v940 = vand.u32 %v939, 4294901760
      %941 = vmatmul.mubr.f32.gmra.mxu0 %v940
      %v942 = vpop.f32.mrf.mxu0
      %v943 = vadd.f32 %v758, %v942
      %v944 = vpop.f32.mrf.mxu0
      %945 = vmatprep.mubr.f32.mxu0 0.0
      %v946 = vand.u32 %v215, 4294901760
      %v947 = vsub.f32 %v215, %v946
      %v948 = vand.u32 %v947, 4294901760
      %949 = vmatmul.mubr.f32.gmra.mxu0 %v948
      %v950 = vpop.f32.mrf.mxu0
      %v951 = vadd.f32 %v765, %v950
      %v952 = vpop.f32.mrf.mxu0
      %953 = vmatprep.mubr.f32.mxu0 0.0
      %v954 = vand.u32 %v218, 4294901760
      %v955 = vsub.f32 %v218, %v954
      %v956 = vand.u32 %v955, 4294901760
      %957 = vmatmul.mubr.f32.gmra.mxu0 %v956
      %v958 = vpop.f32.mrf.mxu0
      %v959 = vadd.f32 %v772, %v958
      %v960 = vpop.f32.mrf.mxu0
      %961 = vmatprep.mubr.f32.mxu0 0.0
      %v962 = vand.u32 %v221, 4294901760
      %v963 = vsub.f32 %v221, %v962
      %v964 = vand.u32 %v963, 4294901760
      %965 = vmatmul.mubr.f32.gmra.mxu0 %v964
      %v966 = vpop.f32.mrf.mxu0
      %v967 = vadd.f32 %v779, %v966
      %v968 = vpop.f32.mrf.mxu0
      %969 = vmatprep.mubr.f32.mxu0 0.0
      %v970 = vand.u32 %v224, 4294901760
      %v971 = vsub.f32 %v224, %v970
      %v972 = vand.u32 %v971, 4294901760
      %973 = vmatmul.mubr.f32.gmra.mxu0 %v972
      %v974 = vpop.f32.mrf.mxu0
      %v975 = vadd.f32 %v786, %v974
      %v976 = vpop.f32.mrf.mxu0
      %977 = vmatprep.mubr.f32.mxu0 0.0
      %v978 = vand.u32 %v227, 4294901760
      %v979 = vsub.f32 %v227, %v978
      %v980 = vand.u32 %v979, 4294901760
      %981 = vmatmul.mubr.f32.gmra.mxu0 %v980
      %v982 = vpop.f32.mrf.mxu0
      %v983 = vadd.f32 %v793, %v982
      %v984 = vpop.f32.mrf.mxu0
      %985 = vmatprep.mubr.f32.mxu0 0.0
      %v986 = vand.u32 %v230, 4294901760
      %v987 = vsub.f32 %v230, %v986
      %v988 = vand.u32 %v987, 4294901760
      %989 = vmatmul.mubr.f32.gmra.mxu0 %v988
      %v990 = vpop.f32.mrf.mxu0
      %v991 = vadd.f32 %v800, %v990
      %v992 = vpop.f32.mrf.mxu0
      %993 = vmatprep.mubr.f32.mxu0 0.0
      %v994 = vand.u32 %v233, 4294901760
      %v995 = vsub.f32 %v233, %v994
      %v996 = vand.u32 %v995, 4294901760
      %997 = vmatmul.mubr.f32.gmra.mxu0 %v996
      %v998 = vpop.f32.mrf.mxu0
      %v999 = vadd.f32 %v807, %v998
      %v1000 = vpop.f32.mrf.mxu0
      %1001 = vmatprep.mubr.f32.mxu0 0.0
      %v1002 = vand.u32 %v236, 4294901760
      %v1003 = vsub.f32 %v236, %v1002
      %v1004 = vand.u32 %v1003, 4294901760
      %1005 = vmatmul.mubr.f32.gmra.mxu0 %v1004
      %v1006 = vpop.f32.mrf.mxu0
      %v1007 = vadd.f32 %v814, %v1006
      %v1008 = vpop.f32.mrf.mxu0
      %1009 = vmatprep.mubr.f32.mxu0 0.0
      %v1010 = vand.u32 %v239, 4294901760
      %v1011 = vsub.f32 %v239, %v1010
      %v1012 = vand.u32 %v1011, 4294901760
      %1013 = vmatmul.mubr.f32.gmra.mxu0 %v1012
      %v1014 = vpop.f32.mrf.mxu0
      %v1015 = vadd.f32 %v821, %v1014
      %v1016 = vpop.f32.mrf.mxu0
      %1017 = vmatprep.mubr.f32.mxu0 0.0
      %v1018 = vand.u32 %v242, 4294901760
      %v1019 = vsub.f32 %v242, %v1018
      %v1020 = vand.u32 %v1019, 4294901760
      %1021 = vmatmul.mubr.f32.gmra.mxu0 %v1020
      %v1022 = vpop.f32.mrf.mxu0
      %v1023 = vadd.f32 %v828, %v1022
      %v1024 = vpop.f32.mrf.mxu0
      %1025 = vmatprep.mubr.f32.mxu0 0.0
      %v1026 = vand.u32 %v245, 4294901760
      %v1027 = vsub.f32 %v245, %v1026
      %v1028 = vand.u32 %v1027, 4294901760
      %1029 = vmatmul.mubr.f32.gmra.mxu0 %v1028
      %v1030 = vpop.f32.mrf.mxu0
      %v1031 = vadd.f32 %v835, %v1030
      %v1032 = vpop.f32.mrf.mxu0
      %1033 = vmatprep.mubr.f32.mxu0 0.0
      %v1034 = vand.u32 %v248, 4294901760
      %v1035 = vsub.f32 %v248, %v1034
      %v1036 = vand.u32 %v1035, 4294901760
      %1037 = vmatmul.mubr.f32.gmra.mxu0 %v1036
      %v1038 = vpop.f32.mrf.mxu0
      %v1039 = vadd.f32 %v842, %v1038
      %v1040 = vpop.f32.mrf.mxu0
      %1041 = vdwg.mxu0
      %1042 = vmatprep.subr.mxu0 0.0
      %1043 = vmatpush1.msra.mxu0 0.0
      %1044 = vmatprep.subr.mxu0 0.0
      %1045 = vmatpush1.msra.mxu0 0.0
      %1046 = vmatprep.subr.mxu0 0.0
      %1047 = vmatpush1.msra.mxu0 0.0
      %1048 = vmatprep.subr.mxu0 0.0
      %1049 = vmatpush1.msra.mxu0 0.0
      %1050 = vmatprep.subr.mxu0 0.0
      %1051 = vmatpush1.msra.mxu0 0.0
      %1052 = vmatprep.subr.mxu0 0.0
      %1053 = vmatpush1.msra.mxu0 0.0
      %1054 = vmatprep.subr.mxu0 0.0
      %1055 = vmatpush1.msra.mxu0 0.0
      %1056 = vmatprep.subr.mxu0 0.0
      %1057 = vmatpush1.msra.mxu0 0.0
      %1058 = vmatprep.subr.mxu0 0.0
      %1059 = vmatpush1.msra.mxu0 0.0
      %1060 = vmatprep.subr.mxu0 0.0
      %1061 = vmatpush1.msra.mxu0 0.0
      %1062 = vmatprep.subr.mxu0 0.0
      %1063 = vmatpush1.msra.mxu0 0.0
      %1064 = vmatprep.subr.mxu0 0.0
      %1065 = vmatpush1.msra.mxu0 0.0
      %1066 = vmatprep.subr.mxu0 0.0
      %v1067 = vand.u32 %v193, 4294901760
      %v1068 = vsub.f32 %v193, %v1067
      %v1069 = vand.u32 %v1068, 4294901760
      %1070 = vmatpush1.msra.mxu0 %v1069
      %1071 = vmatprep.subr.mxu0 0.0
      %v1072 = vand.u32 %v192, 4294901760
      %v1073 = vsub.f32 %v192, %v1072
      %v1074 = vand.u32 %v1073, 4294901760
      %1075 = vmatpush1.msra.mxu0 %v1074
      %1076 = vmatprep.subr.mxu0 0.0
      %v1077 = vand.u32 %v191, 4294901760
      %v1078 = vsub.f32 %v191, %v1077
      %v1079 = vand.u32 %v1078, 4294901760
      %1080 = vmatpush1.msra.mxu0 %v1079
      %1081 = vmatprep.subr.mxu0 0.0
      %v1082 = vand.u32 %v190, 4294901760
      %v1083 = vsub.f32 %v190, %v1082
      %v1084 = vand.u32 %v1083, 4294901760
      %1085 = vmatpush1.msra.mxu0 %v1084
      %1086 = vmatprep.subr.mxu0 0.0
      %1087 = vmatpush2.msra.mxu0 0.0
      %1088 = vmatprep.subr.mxu0 0.0
      %1089 = vmatpush2.msra.mxu0 0.0
      %1090 = vmatprep.subr.mxu0 0.0
      %1091 = vmatpush2.msra.mxu0 0.0
      %1092 = vmatprep.subr.mxu0 0.0
      %1093 = vmatpush2.msra.mxu0 0.0
      %1094 = vmatprep.subr.mxu0 0.0
      %1095 = vmatpush2.msra.mxu0 0.0
      %1096 = vmatprep.subr.mxu0 0.0
      %1097 = vmatpush2.msra.mxu0 0.0
      %1098 = vmatprep.subr.mxu0 0.0
      %1099 = vmatpush2.msra.mxu0 0.0
      %1100 = vmatprep.subr.mxu0 0.0
      %1101 = vmatpush2.msra.mxu0 0.0
      %1102 = vmatprep.subr.mxu0 0.0
      %1103 = vmatpush2.msra.mxu0 0.0
      %1104 = vmatprep.subr.mxu0 0.0
      %1105 = vmatpush2.msra.mxu0 0.0
      %1106 = vmatprep.subr.mxu0 0.0
      %1107 = vmatpush2.msra.mxu0 0.0
      %1108 = vmatprep.subr.mxu0 0.0
      %1109 = vmatpush2.msra.mxu0 0.0
      %1110 = vmatprep.subr.mxu0 0.0
      %1111 = vmatpush2.msra.mxu0 0.0
      %1112 = vmatprep.subr.mxu0 0.0
      %1113 = vmatpush2.msra.mxu0 0.0
      %1114 = vmatprep.subr.mxu0 0.0
      %1115 = vmatpush2.msra.mxu0 0.0
      %1116 = vmatprep.subr.mxu0 0.0
      %1117 = vmatpush2.msra.mxu0 0.0
      %1118 = vmatprep.mubr.f32.mxu0 0.0
      %v1119 = vand.u32 %v203, 4294901760
      %1120 = vmatmul.mubr.f32.gmra.mxu0 %v1119
      %v1121 = vpop.f32.mrf.mxu0
      %v1122 = vadd.f32 %v919, %v1121
      %v1123 = vpop.f32.mrf.mxu0
      %1124 = vmatprep.mubr.f32.mxu0 0.0
      %v1125 = vand.u32 %v206, 4294901760
      %1126 = vmatmul.mubr.f32.gmra.mxu0 %v1125
      %v1127 = vpop.f32.mrf.mxu0
      %v1128 = vadd.f32 %v927, %v1127
      %v1129 = vpop.f32.mrf.mxu0
      %1130 = vmatprep.mubr.f32.mxu0 0.0
      %v1131 = vand.u32 %v209, 4294901760
      %1132 = vmatmul.mubr.f32.gmra.mxu0 %v1131
      %v1133 = vpop.f32.mrf.mxu0
      %v1134 = vadd.f32 %v935, %v1133
      %v1135 = vpop.f32.mrf.mxu0
      %1136 = vmatprep.mubr.f32.mxu0 0.0
      %v1137 = vand.u32 %v212, 4294901760
      %1138 = vmatmul.mubr.f32.gmra.mxu0 %v1137
      %v1139 = vpop.f32.mrf.mxu0
      %v1140 = vadd.f32 %v943, %v1139
      %v1141 = vpop.f32.mrf.mxu0
      %1142 = vmatprep.mubr.f32.mxu0 0.0
      %v1143 = vand.u32 %v215, 4294901760
      %1144 = vmatmul.mubr.f32.gmra.mxu0 %v1143
      %v1145 = vpop.f32.mrf.mxu0
      %v1146 = vadd.f32 %v951, %v1145
      %v1147 = vpop.f32.mrf.mxu0
      %1148 = vmatprep.mubr.f32.mxu0 0.0
      %v1149 = vand.u32 %v218, 4294901760
      %1150 = vmatmul.mubr.f32.gmra.mxu0 %v1149
      %v1151 = vpop.f32.mrf.mxu0
      %v1152 = vadd.f32 %v959, %v1151
      %v1153 = vpop.f32.mrf.mxu0
      %1154 = vmatprep.mubr.f32.mxu0 0.0
      %v1155 = vand.u32 %v221, 4294901760
      %1156 = vmatmul.mubr.f32.gmra.mxu0 %v1155
      %v1157 = vpop.f32.mrf.mxu0
      %v1158 = vadd.f32 %v967, %v1157
      %v1159 = vpop.f32.mrf.mxu0
      %1160 = vmatprep.mubr.f32.mxu0 0.0
      %v1161 = vand.u32 %v224, 4294901760
      %1162 = vmatmul.mubr.f32.gmra.mxu0 %v1161
      %v1163 = vpop.f32.mrf.mxu0
      %v1164 = vadd.f32 %v975, %v1163
      %v1165 = vpop.f32.mrf.mxu0
      %1166 = vmatprep.mubr.f32.mxu0 0.0
      %v1167 = vand.u32 %v227, 4294901760
      %1168 = vmatmul.mubr.f32.gmra.mxu0 %v1167
      %v1169 = vpop.f32.mrf.mxu0
      %v1170 = vadd.f32 %v983, %v1169
      %v1171 = vpop.f32.mrf.mxu0
      %1172 = vmatprep.mubr.f32.mxu0 0.0
      %v1173 = vand.u32 %v230, 4294901760
      %1174 = vmatmul.mubr.f32.gmra.mxu0 %v1173
      %v1175 = vpop.f32.mrf.mxu0
      %v1176 = vadd.f32 %v991, %v1175
      %v1177 = vpop.f32.mrf.mxu0
      %1178 = vmatprep.mubr.f32.mxu0 0.0
      %v1179 = vand.u32 %v233, 4294901760
      %1180 = vmatmul.mubr.f32.gmra.mxu0 %v1179
      %v1181 = vpop.f32.mrf.mxu0
      %v1182 = vadd.f32 %v999, %v1181
      %v1183 = vpop.f32.mrf.mxu0
      %1184 = vmatprep.mubr.f32.mxu0 0.0
      %v1185 = vand.u32 %v236, 4294901760
      %1186 = vmatmul.mubr.f32.gmra.mxu0 %v1185
      %v1187 = vpop.f32.mrf.mxu0
      %v1188 = vadd.f32 %v1007, %v1187
      %v1189 = vpop.f32.mrf.mxu0
      %1190 = vmatprep.mubr.f32.mxu0 0.0
      %v1191 = vand.u32 %v239, 4294901760
      %1192 = vmatmul.mubr.f32.gmra.mxu0 %v1191
      %v1193 = vpop.f32.mrf.mxu0
      %v1194 = vadd.f32 %v1015, %v1193
      %v1195 = vpop.f32.mrf.mxu0
      %1196 = vmatprep.mubr.f32.mxu0 0.0
      %v1197 = vand.u32 %v242, 4294901760
      %1198 = vmatmul.mubr.f32.gmra.mxu0 %v1197
      %v1199 = vpop.f32.mrf.mxu0
      %v1200 = vadd.f32 %v1023, %v1199
      %v1201 = vpop.f32.mrf.mxu0
      %1202 = vmatprep.mubr.f32.mxu0 0.0
      %v1203 = vand.u32 %v245, 4294901760
      %1204 = vmatmul.mubr.f32.gmra.mxu0 %v1203
      %v1205 = vpop.f32.mrf.mxu0
      %v1206 = vadd.f32 %v1031, %v1205
      %v1207 = vpop.f32.mrf.mxu0
      %1208 = vmatprep.mubr.f32.mxu0 0.0
      %v1209 = vand.u32 %v248, 4294901760
      %1210 = vmatmul.mubr.f32.gmra.mxu0 %v1209
      %v1211 = vpop.f32.mrf.mxu0
      %v1212 = vadd.f32 %v1039, %v1211
      %v1213 = vpop.f32.mrf.mxu0
      %1214 = vdwg.mxu0
      %1215 = vmatprep.subr.mxu0 0.0
      %1216 = vmatpush1.msra.mxu0 0.0
      %1217 = vmatprep.subr.mxu0 0.0
      %1218 = vmatpush1.msra.mxu0 0.0
      %1219 = vmatprep.subr.mxu0 0.0
      %1220 = vmatpush1.msra.mxu0 0.0
      %1221 = vmatprep.subr.mxu0 0.0
      %1222 = vmatpush1.msra.mxu0 0.0
      %1223 = vmatprep.subr.mxu0 0.0
      %1224 = vmatpush1.msra.mxu0 0.0
      %1225 = vmatprep.subr.mxu0 0.0
      %1226 = vmatpush1.msra.mxu0 0.0
      %1227 = vmatprep.subr.mxu0 0.0
      %1228 = vmatpush1.msra.mxu0 0.0
      %1229 = vmatprep.subr.mxu0 0.0
      %1230 = vmatpush1.msra.mxu0 0.0
      %1231 = vmatprep.subr.mxu0 0.0
      %1232 = vmatpush1.msra.mxu0 0.0
      %1233 = vmatprep.subr.mxu0 0.0
      %1234 = vmatpush1.msra.mxu0 0.0
      %1235 = vmatprep.subr.mxu0 0.0
      %1236 = vmatpush1.msra.mxu0 0.0
      %1237 = vmatprep.subr.mxu0 0.0
      %1238 = vmatpush1.msra.mxu0 0.0
      %1239 = vmatprep.subr.mxu0 0.0
      %v1240 = vand.u32 %v193, 4294901760
      %1241 = vmatpush1.msra.mxu0 %v1240
      %1242 = vmatprep.subr.mxu0 0.0
      %v1243 = vand.u32 %v192, 4294901760
      %1244 = vmatpush1.msra.mxu0 %v1243
      %1245 = vmatprep.subr.mxu0 0.0
      %v1246 = vand.u32 %v191, 4294901760
      %1247 = vmatpush1.msra.mxu0 %v1246
      %1248 = vmatprep.subr.mxu0 0.0
      %v1249 = vand.u32 %v190, 4294901760
      %1250 = vmatpush1.msra.mxu0 %v1249
      %1251 = vmatprep.subr.mxu0 0.0
      %1252 = vmatpush2.msra.mxu0 0.0
      %1253 = vmatprep.subr.mxu0 0.0
      %1254 = vmatpush2.msra.mxu0 0.0
      %1255 = vmatprep.subr.mxu0 0.0
      %1256 = vmatpush2.msra.mxu0 0.0
      %1257 = vmatprep.subr.mxu0 0.0
      %1258 = vmatpush2.msra.mxu0 0.0
      %1259 = vmatprep.subr.mxu0 0.0
      %1260 = vmatpush2.msra.mxu0 0.0
      %1261 = vmatprep.subr.mxu0 0.0
      %1262 = vmatpush2.msra.mxu0 0.0
      %1263 = vmatprep.subr.mxu0 0.0
      %1264 = vmatpush2.msra.mxu0 0.0
      %1265 = vmatprep.subr.mxu0 0.0
      %1266 = vmatpush2.msra.mxu0 0.0
      %1267 = vmatprep.subr.mxu0 0.0
      %1268 = vmatpush2.msra.mxu0 0.0
      %1269 = vmatprep.subr.mxu0 0.0
      %1270 = vmatpush2.msra.mxu0 0.0
      %1271 = vmatprep.subr.mxu0 0.0
      %1272 = vmatpush2.msra.mxu0 0.0
      %1273 = vmatprep.subr.mxu0 0.0
      %1274 = vmatpush2.msra.mxu0 0.0
      %1275 = vmatprep.subr.mxu0 0.0
      %1276 = vmatpush2.msra.mxu0 0.0
      %1277 = vmatprep.subr.mxu0 0.0
      %1278 = vmatpush2.msra.mxu0 0.0
      %1279 = vmatprep.subr.mxu0 0.0
      %1280 = vmatpush2.msra.mxu0 0.0
      %1281 = vmatprep.subr.mxu0 0.0
      %1282 = vmatpush2.msra.mxu0 0.0
      %1283 = vmatprep.mubr.f32.mxu0 0.0
      %v1284 = vand.u32 %v203, 4294901760
      %1285 = vmatmul.mubr.f32.gmra.mxu0 %v1284
      %v1286 = vpop.f32.mrf.mxu0
      %v1287 = vadd.f32 %v1122, %v1286
      %v1288 = vpop.f32.mrf.mxu0
      %1289 = vmatprep.mubr.f32.mxu0 0.0
      %v1290 = vand.u32 %v206, 4294901760
      %1291 = vmatmul.mubr.f32.gmra.mxu0 %v1290
      %v1292 = vpop.f32.mrf.mxu0
      %v1293 = vadd.f32 %v1128, %v1292
      %v1294 = vpop.f32.mrf.mxu0
      %1295 = vmatprep.mubr.f32.mxu0 0.0
      %v1296 = vand.u32 %v209, 4294901760
      %1297 = vmatmul.mubr.f32.gmra.mxu0 %v1296
      %v1298 = vpop.f32.mrf.mxu0
      %v1299 = vadd.f32 %v1134, %v1298
      %v1300 = vpop.f32.mrf.mxu0
      %1301 = vmatprep.mubr.f32.mxu0 0.0
      %v1302 = vand.u32 %v212, 4294901760
      %1303 = vmatmul.mubr.f32.gmra.mxu0 %v1302
      %v1304 = vpop.f32.mrf.mxu0
      %v1305 = vadd.f32 %v1140, %v1304
      %v1306 = vpop.f32.mrf.mxu0
      %1307 = vmatprep.mubr.f32.mxu0 0.0
      %v1308 = vand.u32 %v215, 4294901760
      %1309 = vmatmul.mubr.f32.gmra.mxu0 %v1308
      %v1310 = vpop.f32.mrf.mxu0
      %v1311 = vadd.f32 %v1146, %v1310
      %v1312 = vpop.f32.mrf.mxu0
      %1313 = vmatprep.mubr.f32.mxu0 0.0
      %v1314 = vand.u32 %v218, 4294901760
      %1315 = vmatmul.mubr.f32.gmra.mxu0 %v1314
      %v1316 = vpop.f32.mrf.mxu0
      %v1317 = vadd.f32 %v1152, %v1316
      %v1318 = vpop.f32.mrf.mxu0
      %1319 = vmatprep.mubr.f32.mxu0 0.0
      %v1320 = vand.u32 %v221, 4294901760
      %1321 = vmatmul.mubr.f32.gmra.mxu0 %v1320
      %v1322 = vpop.f32.mrf.mxu0
      %v1323 = vadd.f32 %v1158, %v1322
      %v1324 = vpop.f32.mrf.mxu0
      %1325 = vmatprep.mubr.f32.mxu0 0.0
      %v1326 = vand.u32 %v224, 4294901760
      %1327 = vmatmul.mubr.f32.gmra.mxu0 %v1326
      %v1328 = vpop.f32.mrf.mxu0
      %v1329 = vadd.f32 %v1164, %v1328
      %v1330 = vpop.f32.mrf.mxu0
      %1331 = vmatprep.mubr.f32.mxu0 0.0
      %v1332 = vand.u32 %v227, 4294901760
      %1333 = vmatmul.mubr.f32.gmra.mxu0 %v1332
      %v1334 = vpop.f32.mrf.mxu0
      %v1335 = vadd.f32 %v1170, %v1334
      %v1336 = vpop.f32.mrf.mxu0
      %1337 = vmatprep.mubr.f32.mxu0 0.0
      %v1338 = vand.u32 %v230, 4294901760
      %1339 = vmatmul.mubr.f32.gmra.mxu0 %v1338
      %v1340 = vpop.f32.mrf.mxu0
      %v1341 = vadd.f32 %v1176, %v1340
      %v1342 = vpop.f32.mrf.mxu0
      %1343 = vmatprep.mubr.f32.mxu0 0.0
      %v1344 = vand.u32 %v233, 4294901760
      %1345 = vmatmul.mubr.f32.gmra.mxu0 %v1344
      %v1346 = vpop.f32.mrf.mxu0
      %v1347 = vadd.f32 %v1182, %v1346
      %v1348 = vpop.f32.mrf.mxu0
      %1349 = vmatprep.mubr.f32.mxu0 0.0
      %v1350 = vand.u32 %v236, 4294901760
      %1351 = vmatmul.mubr.f32.gmra.mxu0 %v1350
      %v1352 = vpop.f32.mrf.mxu0
      %v1353 = vadd.f32 %v1188, %v1352
      %v1354 = vpop.f32.mrf.mxu0
      %1355 = vmatprep.mubr.f32.mxu0 0.0
      %v1356 = vand.u32 %v239, 4294901760
      %1357 = vmatmul.mubr.f32.gmra.mxu0 %v1356
      %v1358 = vpop.f32.mrf.mxu0
      %v1359 = vadd.f32 %v1194, %v1358
      %v1360 = vpop.f32.mrf.mxu0
      %1361 = vmatprep.mubr.f32.mxu0 0.0
      %v1362 = vand.u32 %v242, 4294901760
      %1363 = vmatmul.mubr.f32.gmra.mxu0 %v1362
      %v1364 = vpop.f32.mrf.mxu0
      %v1365 = vadd.f32 %v1200, %v1364
      %v1366 = vpop.f32.mrf.mxu0
      %1367 = vmatprep.mubr.f32.mxu0 0.0
      %v1368 = vand.u32 %v245, 4294901760
      %1369 = vmatmul.mubr.f32.gmra.mxu0 %v1368
      %v1370 = vpop.f32.mrf.mxu0
      %v1371 = vadd.f32 %v1206, %v1370
      %v1372 = vpop.f32.mrf.mxu0
      %1373 = vmatprep.mubr.f32.mxu0 0.0
      %v1374 = vand.u32 %v248, 4294901760
      %1375 = vmatmul.mubr.f32.gmra.mxu0 %v1374
      %v1376 = vpop.f32.mrf.mxu0
      %v1377 = vadd.f32 %v1212, %v1376
      %v1378 = vpop.f32.mrf.mxu0
      %1379 = vdwg.mxu0
      %v1380 = vand.u32 2147483647, %v1287
      %vm1381 = vcmp.le.f32.partialorder %v1380, 0.7853982
      %vm1382 = vcmp.lt.s32.totalorder %v1287, 0
      %v1383 = vand.u32 %v1287, 2139095040
      %v1384 = vshrl.u32 %v1383, 23
      %v1385 = vsub.s32 %v1384, 127
      %v1386 = vand.u32 2147483647, %v1287
      %v1387 = vand.u32 %v1386, 8388607
      %v1388 = vor.u32 %v1387, 8388608
      %v1389 = vsub.s32 0, %v1388
      %v1390 = vadd.s32 %v1385, 1
      %vm1391 = vcmp.gt.s32.totalorder %v1390, 0
      %v1392 = vsel %vm1391, %v1390, 0
      %v1393 = vshrl.u32 %v1392, 5
      %v1394 = vand.u32 %v1392, 31
      %v1395 = vsub.s32 32, %v1394
      %v1396 = vshrl.u32 683565275, %v1395
      %v1397 = vshll.u32 683565275, %v1394
      %v1398 = vshrl.u32 2475754826, %v1395
      %v1399 = vor.u32 %v1397, %v1398
      %v1400 = vshll.u32 2475754826, %v1394
      %v1401 = vshrl.u32 2131351028, %v1395
      %v1402 = vor.u32 %v1400, %v1401
      %v1403 = vshll.u32 2131351028, %v1394
      %v1404 = vshrl.u32 2102212464, %v1395
      %v1405 = vor.u32 %v1403, %v1404
      %v1406 = vshll.u32 2102212464, %v1394
      %v1407 = vshrl.u32 920167782, %v1395
      %v1408 = vor.u32 %v1406, %v1407
      %v1409 = vshll.u32 920167782, %v1394
      %v1410 = vshrl.u32 1326507024, %v1395
      %v1411 = vor.u32 %v1409, %v1410
      %vm1412 = vcmp.lt.s32.totalorder %v1393, 1
      %vm1413 = vcmp.lt.s32.totalorder %v1393, 2
      %vm1414 = vcmp.lt.s32.totalorder %v1393, 3
      %vm1415 = vcmp.lt.s32.totalorder %v1393, 4
      %v1416 = vsel %vm1412, %v1396, %v1399
      %v1417 = vsel %vm1415, %v1405, 2102212464
      %v1418 = vsel %vm1414, %v1402, %v1417
      %v1419 = vsel %vm1413, %v1416, %v1418
      %v1420 = vsel %vm1412, %v1399, %v1402
      %v1421 = vsel %vm1415, %v1408, 920167782
      %v1422 = vsel %vm1414, %v1405, %v1421
      %v1423 = vsel %vm1413, %v1420, %v1422
      %v1424 = vsel %vm1412, %v1402, %v1405
      %v1425 = vsel %vm1415, %v1411, 1326507024
      %v1426 = vsel %vm1414, %v1408, %v1425
      %v1427 = vsel %vm1413, %v1424, %v1426
      %v1428 = vshll.u32 %v1388, 8
      %v1429 = vmul.u32.u64.compose %v1428, %v1427
      %v1430 = vextract.low.u32 %v1429
      %v1431 = vextract.high.u32 %v1429
      %v1432 = vmul.u32.u64.compose %v1428, %v1423
      %v1433 = vextract.low.u32 %v1432
      %v1434 = vextract.high.u32 %v1432
      %v1435 = vmul.u32 %v1428, %v1419
      %v1436 = vadd.s32 %v1431, %v1433
      %vm1437 = vc.u32 %v1431, %v1433
      %v1438 = vadd.s32 %v1434, 1
      %v1439 = vsel %vm1437, %v1438, %v1434
      %v1440 = vadd.s32 %v1435, %v1439
      %v1441 = vadd.s32 %v1440, 536870912
      %v1442 = vshrl.u32 %v1441, 30
      %v1443 = vshll.u32 %v1442, 30
      %v1444 = vsub.s32 %v1440, %v1443
      %vm1445 = vcmp.lt.s32.totalorder %v1444, 0
      %v1446 = vsub.s32 0, %v1444
      %v1447 = vsel %vm1445, %v1446, %v1444
      %v1448 = vclz %v1447
      %v1449 = vsub.s32 %v1448, 2
      %vm1450 = vcmp.gt.s32.totalorder 0, %v1449
      %v1451 = vsel %vm1450, 0, %v1449
      %v1452 = vsub.s32 32, %v1451
      %v1453 = vshll.u32 %v1444, %v1451
      %v1454 = vshrl.u32 %v1436, %v1452
      %v1455 = vor.u32 %v1453, %v1454
      %v1456 = vsub.s32 4294967266, %v1451
      %v1457 = vadd.s32 %v1456, 127
      %v1458 = vshll.u32 %v1457, 23
      %v1459 = vor.u32 4788187, %v1458
      %v1460 = vand.u32 2147483647, %v1459
      %v1462 = vcvt.s32.f32 %v1455
      %v1463 = vmul.f32 %v1462, %v1460
      %v1464 = vxor.u32 %v1463, 2147483648
      %v1465 = vsel %vm1382, %v1464, %v1463
      %v1466 = vsub.s32 4, %v1442
      %v1467 = vsel %vm1382, %v1466, %v1442
      %v1468 = vsel %vm1381, %v1287, %v1465
      %v1469 = vsel %vm1381, 0, %v1467
      %v1470 = vcosq.f32.pop %v1468
      %v1471 = vsinq.f32.pop %v1468
      %vm1472 = vweird.f32 %v1287
      %v1473 = vand.u32 %v1469, 3
      %vm1474 = vcmp.lt.s32.totalorder %v1473, 2
      %vm1475 = vcmp.eq.s32.totalorder %v1473, 0
      %v1476 = vxor.u32 %v1471, 2147483648
      %v1477 = vsel %vm1475, %v1470, %v1476
      %vm1478 = vcmp.eq.s32.totalorder %v1473, 2
      %v1479 = vxor.u32 %v1470, 2147483648
      %v1480 = vsel %vm1478, %v1479, %v1471
      %v1481 = vsel %vm1474, %v1477, %v1480
      %v1482 = vsel %vm1472, nan, %v1481
      %v1483 = vand.u32 2147483647, %v1293
      %vm1484 = vcmp.le.f32.partialorder %v1483, 0.7853982
      %vm1485 = vcmp.lt.s32.totalorder %v1293, 0
      %v1486 = vand.u32 %v1293, 2139095040
      %v1487 = vshrl.u32 %v1486, 23
      %v1488 = vsub.s32 %v1487, 127
      %v1489 = vand.u32 2147483647, %v1293
      %v1490 = vand.u32 %v1489, 8388607
      %v1491 = vor.u32 %v1490, 8388608
      %v1492 = vsub.s32 0, %v1491
      %v1493 = vadd.s32 %v1488, 1
      %vm1494 = vcmp.gt.s32.totalorder %v1493, 0
      %v1495 = vsel %vm1494, %v1493, 0
      %v1496 = vshrl.u32 %v1495, 5
      %v1497 = vand.u32 %v1495, 31
      %v1498 = vsub.s32 32, %v1497
      %v1499 = vshrl.u32 683565275, %v1498
      %v1500 = vshll.u32 683565275, %v1497
      %v1501 = vshrl.u32 2475754826, %v1498
      %v1502 = vor.u32 %v1500, %v1501
      %v1503 = vshll.u32 2475754826, %v1497
      %v1504 = vshrl.u32 2131351028, %v1498
      %v1505 = vor.u32 %v1503, %v1504
      %v1506 = vshll.u32 2131351028, %v1497
      %v1507 = vshrl.u32 2102212464, %v1498
      %v1508 = vor.u32 %v1506, %v1507
      %v1509 = vshll.u32 2102212464, %v1497
      %v1510 = vshrl.u32 920167782, %v1498
      %v1511 = vor.u32 %v1509, %v1510
      %v1512 = vshll.u32 920167782, %v1497
      %v1513 = vshrl.u32 1326507024, %v1498
      %v1514 = vor.u32 %v1512, %v1513
      %vm1515 = vcmp.lt.s32.totalorder %v1496, 1
      %vm1516 = vcmp.lt.s32.totalorder %v1496, 2
      %vm1517 = vcmp.lt.s32.totalorder %v1496, 3
      %vm1518 = vcmp.lt.s32.totalorder %v1496, 4
      %v1519 = vsel %vm1515, %v1499, %v1502
      %v1520 = vsel %vm1518, %v1508, 2102212464
      %v1521 = vsel %vm1517, %v1505, %v1520
      %v1522 = vsel %vm1516, %v1519, %v1521
      %v1523 = vsel %vm1515, %v1502, %v1505
      %v1524 = vsel %vm1518, %v1511, 920167782
      %v1525 = vsel %vm1517, %v1508, %v1524
      %v1526 = vsel %vm1516, %v1523, %v1525
      %v1527 = vsel %vm1515, %v1505, %v1508
      %v1528 = vsel %vm1518, %v1514, 1326507024
      %v1529 = vsel %vm1517, %v1511, %v1528
      %v1530 = vsel %vm1516, %v1527, %v1529
      %v1531 = vshll.u32 %v1491, 8
      %v1532 = vmul.u32.u64.compose %v1531, %v1530
      %v1533 = vextract.low.u32 %v1532
      %v1534 = vextract.high.u32 %v1532
      %v1535 = vmul.u32.u64.compose %v1531, %v1526
      %v1536 = vextract.low.u32 %v1535
      %v1537 = vextract.high.u32 %v1535
      %v1538 = vmul.u32 %v1531, %v1522
      %v1539 = vadd.s32 %v1534, %v1536
      %vm1540 = vc.u32 %v1534, %v1536
      %v1541 = vadd.s32 %v1537, 1
      %v1542 = vsel %vm1540, %v1541, %v1537
      %v1543 = vadd.s32 %v1538, %v1542
      %v1544 = vadd.s32 %v1543, 536870912
      %v1545 = vshrl.u32 %v1544, 30
      %v1546 = vshll.u32 %v1545, 30
      %v1547 = vsub.s32 %v1543, %v1546
      %vm1548 = vcmp.lt.s32.totalorder %v1547, 0
      %v1549 = vsub.s32 0, %v1547
      %v1550 = vsel %vm1548, %v1549, %v1547
      %v1551 = vclz %v1550
      %v1552 = vsub.s32 %v1551, 2
      %vm1553 = vcmp.gt.s32.totalorder 0, %v1552
      %v1554 = vsel %vm1553, 0, %v1552
      %v1555 = vsub.s32 32, %v1554
      %v1556 = vshll.u32 %v1547, %v1554
      %v1557 = vshrl.u32 %v1539, %v1555
      %v1558 = vor.u32 %v1556, %v1557
      %v1559 = vsub.s32 4294967266, %v1554
      %v1560 = vadd.s32 %v1559, 127
      %v1561 = vshll.u32 %v1560, 23
      %v1562 = vor.u32 4788187, %v1561
      %v1563 = vand.u32 2147483647, %v1562
      %v1565 = vcvt.s32.f32 %v1558
      %v1566 = vmul.f32 %v1565, %v1563
      %v1567 = vxor.u32 %v1566, 2147483648
      %v1568 = vsel %vm1485, %v1567, %v1566
      %v1569 = vsub.s32 4, %v1545
      %v1570 = vsel %vm1485, %v1569, %v1545
      %v1571 = vsel %vm1484, %v1293, %v1568
      %v1572 = vsel %vm1484, 0, %v1570
      %v1573 = vcosq.f32.pop %v1571
      %v1574 = vsinq.f32.pop %v1571
      %vm1575 = vweird.f32 %v1293
      %v1576 = vand.u32 %v1572, 3
      %vm1577 = vcmp.lt.s32.totalorder %v1576, 2
      %vm1578 = vcmp.eq.s32.totalorder %v1576, 0
      %v1579 = vxor.u32 %v1574, 2147483648
      %v1580 = vsel %vm1578, %v1573, %v1579
      %vm1581 = vcmp.eq.s32.totalorder %v1576, 2
      %v1582 = vxor.u32 %v1573, 2147483648
      %v1583 = vsel %vm1581, %v1582, %v1574
      %v1584 = vsel %vm1577, %v1580, %v1583
      %v1585 = vsel %vm1575, nan, %v1584
      %v1586 = vand.u32 2147483647, %v1299
      %vm1587 = vcmp.le.f32.partialorder %v1586, 0.7853982
      %vm1588 = vcmp.lt.s32.totalorder %v1299, 0
      %v1589 = vand.u32 %v1299, 2139095040
      %v1590 = vshrl.u32 %v1589, 23
      %v1591 = vsub.s32 %v1590, 127
      %v1592 = vand.u32 2147483647, %v1299
      %v1593 = vand.u32 %v1592, 8388607
      %v1594 = vor.u32 %v1593, 8388608
      %v1595 = vsub.s32 0, %v1594
      %v1596 = vadd.s32 %v1591, 1
      %vm1597 = vcmp.gt.s32.totalorder %v1596, 0
      %v1598 = vsel %vm1597, %v1596, 0
      %v1599 = vshrl.u32 %v1598, 5
      %v1600 = vand.u32 %v1598, 31
      %v1601 = vsub.s32 32, %v1600
      %v1602 = vshrl.u32 683565275, %v1601
      %v1603 = vshll.u32 683565275, %v1600
      %v1604 = vshrl.u32 2475754826, %v1601
      %v1605 = vor.u32 %v1603, %v1604
      %v1606 = vshll.u32 2475754826, %v1600
      %v1607 = vshrl.u32 2131351028, %v1601
      %v1608 = vor.u32 %v1606, %v1607
      %v1609 = vshll.u32 2131351028, %v1600
      %v1610 = vshrl.u32 2102212464, %v1601
      %v1611 = vor.u32 %v1609, %v1610
      %v1612 = vshll.u32 2102212464, %v1600
      %v1613 = vshrl.u32 920167782, %v1601
      %v1614 = vor.u32 %v1612, %v1613
      %v1615 = vshll.u32 920167782, %v1600
      %v1616 = vshrl.u32 1326507024, %v1601
      %v1617 = vor.u32 %v1615, %v1616
      %vm1618 = vcmp.lt.s32.totalorder %v1599, 1
      %vm1619 = vcmp.lt.s32.totalorder %v1599, 2
      %vm1620 = vcmp.lt.s32.totalorder %v1599, 3
      %vm1621 = vcmp.lt.s32.totalorder %v1599, 4
      %v1622 = vsel %vm1618, %v1602, %v1605
      %v1623 = vsel %vm1621, %v1611, 2102212464
      %v1624 = vsel %vm1620, %v1608, %v1623
      %v1625 = vsel %vm1619, %v1622, %v1624
      %v1626 = vsel %vm1618, %v1605, %v1608
      %v1627 = vsel %vm1621, %v1614, 920167782
      %v1628 = vsel %vm1620, %v1611, %v1627
      %v1629 = vsel %vm1619, %v1626, %v1628
      %v1630 = vsel %vm1618, %v1608, %v1611
      %v1631 = vsel %vm1621, %v1617, 1326507024
      %v1632 = vsel %vm1620, %v1614, %v1631
      %v1633 = vsel %vm1619, %v1630, %v1632
      %v1634 = vshll.u32 %v1594, 8
      %v1635 = vmul.u32.u64.compose %v1634, %v1633
      %v1636 = vextract.low.u32 %v1635
      %v1637 = vextract.high.u32 %v1635
      %v1638 = vmul.u32.u64.compose %v1634, %v1629
      %v1639 = vextract.low.u32 %v1638
      %v1640 = vextract.high.u32 %v1638
      %v1641 = vmul.u32 %v1634, %v1625
      %v1642 = vadd.s32 %v1637, %v1639
      %vm1643 = vc.u32 %v1637, %v1639
      %v1644 = vadd.s32 %v1640, 1
      %v1645 = vsel %vm1643, %v1644, %v1640
      %v1646 = vadd.s32 %v1641, %v1645
      %v1647 = vadd.s32 %v1646, 536870912
      %v1648 = vshrl.u32 %v1647, 30
      %v1649 = vshll.u32 %v1648, 30
      %v1650 = vsub.s32 %v1646, %v1649
      %vm1651 = vcmp.lt.s32.totalorder %v1650, 0
      %v1652 = vsub.s32 0, %v1650
      %v1653 = vsel %vm1651, %v1652, %v1650
      %v1654 = vclz %v1653
      %v1655 = vsub.s32 %v1654, 2
      %vm1656 = vcmp.gt.s32.totalorder 0, %v1655
      %v1657 = vsel %vm1656, 0, %v1655
      %v1658 = vsub.s32 32, %v1657
      %v1659 = vshll.u32 %v1650, %v1657
      %v1660 = vshrl.u32 %v1642, %v1658
      %v1661 = vor.u32 %v1659, %v1660
      %v1662 = vsub.s32 4294967266, %v1657
      %v1663 = vadd.s32 %v1662, 127
      %v1664 = vshll.u32 %v1663, 23
      %v1665 = vor.u32 4788187, %v1664
      %v1666 = vand.u32 2147483647, %v1665
      %v1668 = vcvt.s32.f32 %v1661
      %v1669 = vmul.f32 %v1668, %v1666
      %v1670 = vxor.u32 %v1669, 2147483648
      %v1671 = vsel %vm1588, %v1670, %v1669
      %v1672 = vsub.s32 4, %v1648
      %v1673 = vsel %vm1588, %v1672, %v1648
      %v1674 = vsel %vm1587, %v1299, %v1671
      %v1675 = vsel %vm1587, 0, %v1673
      %v1676 = vcosq.f32.pop %v1674
      %v1677 = vsinq.f32.pop %v1674
      %vm1678 = vweird.f32 %v1299
      %v1679 = vand.u32 %v1675, 3
      %vm1680 = vcmp.lt.s32.totalorder %v1679, 2
      %vm1681 = vcmp.eq.s32.totalorder %v1679, 0
      %v1682 = vxor.u32 %v1677, 2147483648
      %v1683 = vsel %vm1681, %v1676, %v1682
      %vm1684 = vcmp.eq.s32.totalorder %v1679, 2
      %v1685 = vxor.u32 %v1676, 2147483648
      %v1686 = vsel %vm1684, %v1685, %v1677
      %v1687 = vsel %vm1680, %v1683, %v1686
      %v1688 = vsel %vm1678, nan, %v1687
      %v1689 = vand.u32 2147483647, %v1305
      %vm1690 = vcmp.le.f32.partialorder %v1689, 0.7853982
      %vm1691 = vcmp.lt.s32.totalorder %v1305, 0
      %v1692 = vand.u32 %v1305, 2139095040
      %v1693 = vshrl.u32 %v1692, 23
      %v1694 = vsub.s32 %v1693, 127
      %v1695 = vand.u32 2147483647, %v1305
      %v1696 = vand.u32 %v1695, 8388607
      %v1697 = vor.u32 %v1696, 8388608
      %v1698 = vsub.s32 0, %v1697
      %v1699 = vadd.s32 %v1694, 1
      %vm1700 = vcmp.gt.s32.totalorder %v1699, 0
      %v1701 = vsel %vm1700, %v1699, 0
      %v1702 = vshrl.u32 %v1701, 5
      %v1703 = vand.u32 %v1701, 31
      %v1704 = vsub.s32 32, %v1703
      %v1705 = vshrl.u32 683565275, %v1704
      %v1706 = vshll.u32 683565275, %v1703
      %v1707 = vshrl.u32 2475754826, %v1704
      %v1708 = vor.u32 %v1706, %v1707
      %v1709 = vshll.u32 2475754826, %v1703
      %v1710 = vshrl.u32 2131351028, %v1704
      %v1711 = vor.u32 %v1709, %v1710
      %v1712 = vshll.u32 2131351028, %v1703
      %v1713 = vshrl.u32 2102212464, %v1704
      %v1714 = vor.u32 %v1712, %v1713
      %v1715 = vshll.u32 2102212464, %v1703
      %v1716 = vshrl.u32 920167782, %v1704
      %v1717 = vor.u32 %v1715, %v1716
      %v1718 = vshll.u32 920167782, %v1703
      %v1719 = vshrl.u32 1326507024, %v1704
      %v1720 = vor.u32 %v1718, %v1719
      %vm1721 = vcmp.lt.s32.totalorder %v1702, 1
      %vm1722 = vcmp.lt.s32.totalorder %v1702, 2
      %vm1723 = vcmp.lt.s32.totalorder %v1702, 3
      %vm1724 = vcmp.lt.s32.totalorder %v1702, 4
      %v1725 = vsel %vm1721, %v1705, %v1708
      %v1726 = vsel %vm1724, %v1714, 2102212464
      %v1727 = vsel %vm1723, %v1711, %v1726
      %v1728 = vsel %vm1722, %v1725, %v1727
      %v1729 = vsel %vm1721, %v1708, %v1711
      %v1730 = vsel %vm1724, %v1717, 920167782
      %v1731 = vsel %vm1723, %v1714, %v1730
      %v1732 = vsel %vm1722, %v1729, %v1731
      %v1733 = vsel %vm1721, %v1711, %v1714
      %v1734 = vsel %vm1724, %v1720, 1326507024
      %v1735 = vsel %vm1723, %v1717, %v1734
      %v1736 = vsel %vm1722, %v1733, %v1735
      %v1737 = vshll.u32 %v1697, 8
      %v1738 = vmul.u32.u64.compose %v1737, %v1736
      %v1739 = vextract.low.u32 %v1738
      %v1740 = vextract.high.u32 %v1738
      %v1741 = vmul.u32.u64.compose %v1737, %v1732
      %v1742 = vextract.low.u32 %v1741
      %v1743 = vextract.high.u32 %v1741
      %v1744 = vmul.u32 %v1737, %v1728
      %v1745 = vadd.s32 %v1740, %v1742
      %vm1746 = vc.u32 %v1740, %v1742
      %v1747 = vadd.s32 %v1743, 1
      %v1748 = vsel %vm1746, %v1747, %v1743
      %v1749 = vadd.s32 %v1744, %v1748
      %v1750 = vadd.s32 %v1749, 536870912
      %v1751 = vshrl.u32 %v1750, 30
      %v1752 = vshll.u32 %v1751, 30
      %v1753 = vsub.s32 %v1749, %v1752
      %vm1754 = vcmp.lt.s32.totalorder %v1753, 0
      %v1755 = vsub.s32 0, %v1753
      %v1756 = vsel %vm1754, %v1755, %v1753
      %v1757 = vclz %v1756
      %v1758 = vsub.s32 %v1757, 2
      %vm1759 = vcmp.gt.s32.totalorder 0, %v1758
      %v1760 = vsel %vm1759, 0, %v1758
      %v1761 = vsub.s32 32, %v1760
      %v1762 = vshll.u32 %v1753, %v1760
      %v1763 = vshrl.u32 %v1745, %v1761
      %v1764 = vor.u32 %v1762, %v1763
      %v1765 = vsub.s32 4294967266, %v1760
      %v1766 = vadd.s32 %v1765, 127
      %v1767 = vshll.u32 %v1766, 23
      %v1768 = vor.u32 4788187, %v1767
      %v1769 = vand.u32 2147483647, %v1768
      %v1771 = vcvt.s32.f32 %v1764
      %v1772 = vmul.f32 %v1771, %v1769
      %v1773 = vxor.u32 %v1772, 2147483648
      %v1774 = vsel %vm1691, %v1773, %v1772
      %v1775 = vsub.s32 4, %v1751
      %v1776 = vsel %vm1691, %v1775, %v1751
      %v1777 = vsel %vm1690, %v1305, %v1774
      %v1778 = vsel %vm1690, 0, %v1776
      %v1779 = vcosq.f32.pop %v1777
      %v1780 = vsinq.f32.pop %v1777
      %vm1781 = vweird.f32 %v1305
      %v1782 = vand.u32 %v1778, 3
      %vm1783 = vcmp.lt.s32.totalorder %v1782, 2
      %vm1784 = vcmp.eq.s32.totalorder %v1782, 0
      %v1785 = vxor.u32 %v1780, 2147483648
      %v1786 = vsel %vm1784, %v1779, %v1785
      %vm1787 = vcmp.eq.s32.totalorder %v1782, 2
      %v1788 = vxor.u32 %v1779, 2147483648
      %v1789 = vsel %vm1787, %v1788, %v1780
      %v1790 = vsel %vm1783, %v1786, %v1789
      %v1791 = vsel %vm1781, nan, %v1790
      %v1792 = vand.u32 2147483647, %v1311
      %vm1793 = vcmp.le.f32.partialorder %v1792, 0.7853982
      %vm1794 = vcmp.lt.s32.totalorder %v1311, 0
      %v1795 = vand.u32 %v1311, 2139095040
      %v1796 = vshrl.u32 %v1795, 23
      %v1797 = vsub.s32 %v1796, 127
      %v1798 = vand.u32 2147483647, %v1311
      %v1799 = vand.u32 %v1798, 8388607
      %v1800 = vor.u32 %v1799, 8388608
      %v1801 = vsub.s32 0, %v1800
      %v1802 = vadd.s32 %v1797, 1
      %vm1803 = vcmp.gt.s32.totalorder %v1802, 0
      %v1804 = vsel %vm1803, %v1802, 0
      %v1805 = vshrl.u32 %v1804, 5
      %v1806 = vand.u32 %v1804, 31
      %v1807 = vsub.s32 32, %v1806
      %v1808 = vshrl.u32 683565275, %v1807
      %v1809 = vshll.u32 683565275, %v1806
      %v1810 = vshrl.u32 2475754826, %v1807
      %v1811 = vor.u32 %v1809, %v1810
      %v1812 = vshll.u32 2475754826, %v1806
      %v1813 = vshrl.u32 2131351028, %v1807
      %v1814 = vor.u32 %v1812, %v1813
      %v1815 = vshll.u32 2131351028, %v1806
      %v1816 = vshrl.u32 2102212464, %v1807
      %v1817 = vor.u32 %v1815, %v1816
      %v1818 = vshll.u32 2102212464, %v1806
      %v1819 = vshrl.u32 920167782, %v1807
      %v1820 = vor.u32 %v1818, %v1819
      %v1821 = vshll.u32 920167782, %v1806
      %v1822 = vshrl.u32 1326507024, %v1807
      %v1823 = vor.u32 %v1821, %v1822
      %vm1824 = vcmp.lt.s32.totalorder %v1805, 1
      %vm1825 = vcmp.lt.s32.totalorder %v1805, 2
      %vm1826 = vcmp.lt.s32.totalorder %v1805, 3
      %vm1827 = vcmp.lt.s32.totalorder %v1805, 4
      %v1828 = vsel %vm1824, %v1808, %v1811
      %v1829 = vsel %vm1827, %v1817, 2102212464
      %v1830 = vsel %vm1826, %v1814, %v1829
      %v1831 = vsel %vm1825, %v1828, %v1830
      %v1832 = vsel %vm1824, %v1811, %v1814
      %v1833 = vsel %vm1827, %v1820, 920167782
      %v1834 = vsel %vm1826, %v1817, %v1833
      %v1835 = vsel %vm1825, %v1832, %v1834
      %v1836 = vsel %vm1824, %v1814, %v1817
      %v1837 = vsel %vm1827, %v1823, 1326507024
      %v1838 = vsel %vm1826, %v1820, %v1837
      %v1839 = vsel %vm1825, %v1836, %v1838
      %v1840 = vshll.u32 %v1800, 8
      %v1841 = vmul.u32.u64.compose %v1840, %v1839
      %v1842 = vextract.low.u32 %v1841
      %v1843 = vextract.high.u32 %v1841
      %v1844 = vmul.u32.u64.compose %v1840, %v1835
      %v1845 = vextract.low.u32 %v1844
      %v1846 = vextract.high.u32 %v1844
      %v1847 = vmul.u32 %v1840, %v1831
      %v1848 = vadd.s32 %v1843, %v1845
      %vm1849 = vc.u32 %v1843, %v1845
      %v1850 = vadd.s32 %v1846, 1
      %v1851 = vsel %vm1849, %v1850, %v1846
      %v1852 = vadd.s32 %v1847, %v1851
      %v1853 = vadd.s32 %v1852, 536870912
      %v1854 = vshrl.u32 %v1853, 30
      %v1855 = vshll.u32 %v1854, 30
      %v1856 = vsub.s32 %v1852, %v1855
      %vm1857 = vcmp.lt.s32.totalorder %v1856, 0
      %v1858 = vsub.s32 0, %v1856
      %v1859 = vsel %vm1857, %v1858, %v1856
      %v1860 = vclz %v1859
      %v1861 = vsub.s32 %v1860, 2
      %vm1862 = vcmp.gt.s32.totalorder 0, %v1861
      %v1863 = vsel %vm1862, 0, %v1861
      %v1864 = vsub.s32 32, %v1863
      %v1865 = vshll.u32 %v1856, %v1863
      %v1866 = vshrl.u32 %v1848, %v1864
      %v1867 = vor.u32 %v1865, %v1866
      %v1868 = vsub.s32 4294967266, %v1863
      %v1869 = vadd.s32 %v1868, 127
      %v1870 = vshll.u32 %v1869, 23
      %v1871 = vor.u32 4788187, %v1870
      %v1872 = vand.u32 2147483647, %v1871
      %v1874 = vcvt.s32.f32 %v1867
      %v1875 = vmul.f32 %v1874, %v1872
      %v1876 = vxor.u32 %v1875, 2147483648
      %v1877 = vsel %vm1794, %v1876, %v1875
      %v1878 = vsub.s32 4, %v1854
      %v1879 = vsel %vm1794, %v1878, %v1854
      %v1880 = vsel %vm1793, %v1311, %v1877
      %v1881 = vsel %vm1793, 0, %v1879
      %v1882 = vcosq.f32.pop %v1880
      %v1883 = vsinq.f32.pop %v1880
      %vm1884 = vweird.f32 %v1311
      %v1885 = vand.u32 %v1881, 3
      %vm1886 = vcmp.lt.s32.totalorder %v1885, 2
      %vm1887 = vcmp.eq.s32.totalorder %v1885, 0
      %v1888 = vxor.u32 %v1883, 2147483648
      %v1889 = vsel %vm1887, %v1882, %v1888
      %vm1890 = vcmp.eq.s32.totalorder %v1885, 2
      %v1891 = vxor.u32 %v1882, 2147483648
      %v1892 = vsel %vm1890, %v1891, %v1883
      %v1893 = vsel %vm1886, %v1889, %v1892
      %v1894 = vsel %vm1884, nan, %v1893
      %v1895 = vand.u32 2147483647, %v1317
      %vm1896 = vcmp.le.f32.partialorder %v1895, 0.7853982
      %vm1897 = vcmp.lt.s32.totalorder %v1317, 0
      %v1898 = vand.u32 %v1317, 2139095040
      %v1899 = vshrl.u32 %v1898, 23
      %v1900 = vsub.s32 %v1899, 127
      %v1901 = vand.u32 2147483647, %v1317
      %v1902 = vand.u32 %v1901, 8388607
      %v1903 = vor.u32 %v1902, 8388608
      %v1904 = vsub.s32 0, %v1903
      %v1905 = vadd.s32 %v1900, 1
      %vm1906 = vcmp.gt.s32.totalorder %v1905, 0
      %v1907 = vsel %vm1906, %v1905, 0
      %v1908 = vshrl.u32 %v1907, 5
      %v1909 = vand.u32 %v1907, 31
      %v1910 = vsub.s32 32, %v1909
      %v1911 = vshrl.u32 683565275, %v1910
      %v1912 = vshll.u32 683565275, %v1909
      %v1913 = vshrl.u32 2475754826, %v1910
      %v1914 = vor.u32 %v1912, %v1913
      %v1915 = vshll.u32 2475754826, %v1909
      %v1916 = vshrl.u32 2131351028, %v1910
      %v1917 = vor.u32 %v1915, %v1916
      %v1918 = vshll.u32 2131351028, %v1909
      %v1919 = vshrl.u32 2102212464, %v1910
      %v1920 = vor.u32 %v1918, %v1919
      %v1921 = vshll.u32 2102212464, %v1909
      %v1922 = vshrl.u32 920167782, %v1910
      %v1923 = vor.u32 %v1921, %v1922
      %v1924 = vshll.u32 920167782, %v1909
      %v1925 = vshrl.u32 1326507024, %v1910
      %v1926 = vor.u32 %v1924, %v1925
      %vm1927 = vcmp.lt.s32.totalorder %v1908, 1
      %vm1928 = vcmp.lt.s32.totalorder %v1908, 2
      %vm1929 = vcmp.lt.s32.totalorder %v1908, 3
      %vm1930 = vcmp.lt.s32.totalorder %v1908, 4
      %v1931 = vsel %vm1927, %v1911, %v1914
      %v1932 = vsel %vm1930, %v1920, 2102212464
      %v1933 = vsel %vm1929, %v1917, %v1932
      %v1934 = vsel %vm1928, %v1931, %v1933
      %v1935 = vsel %vm1927, %v1914, %v1917
      %v1936 = vsel %vm1930, %v1923, 920167782
      %v1937 = vsel %vm1929, %v1920, %v1936
      %v1938 = vsel %vm1928, %v1935, %v1937
      %v1939 = vsel %vm1927, %v1917, %v1920
      %v1940 = vsel %vm1930, %v1926, 1326507024
      %v1941 = vsel %vm1929, %v1923, %v1940
      %v1942 = vsel %vm1928, %v1939, %v1941
      %v1943 = vshll.u32 %v1903, 8
      %v1944 = vmul.u32.u64.compose %v1943, %v1942
      %v1945 = vextract.low.u32 %v1944
      %v1946 = vextract.high.u32 %v1944
      %v1947 = vmul.u32.u64.compose %v1943, %v1938
      %v1948 = vextract.low.u32 %v1947
      %v1949 = vextract.high.u32 %v1947
      %v1950 = vmul.u32 %v1943, %v1934
      %v1951 = vadd.s32 %v1946, %v1948
      %vm1952 = vc.u32 %v1946, %v1948
      %v1953 = vadd.s32 %v1949, 1
      %v1954 = vsel %vm1952, %v1953, %v1949
      %v1955 = vadd.s32 %v1950, %v1954
      %v1956 = vadd.s32 %v1955, 536870912
      %v1957 = vshrl.u32 %v1956, 30
      %v1958 = vshll.u32 %v1957, 30
      %v1959 = vsub.s32 %v1955, %v1958
      %vm1960 = vcmp.lt.s32.totalorder %v1959, 0
      %v1961 = vsub.s32 0, %v1959
      %v1962 = vsel %vm1960, %v1961, %v1959
      %v1963 = vclz %v1962
      %v1964 = vsub.s32 %v1963, 2
      %vm1965 = vcmp.gt.s32.totalorder 0, %v1964
      %v1966 = vsel %vm1965, 0, %v1964
      %v1967 = vsub.s32 32, %v1966
      %v1968 = vshll.u32 %v1959, %v1966
      %v1969 = vshrl.u32 %v1951, %v1967
      %v1970 = vor.u32 %v1968, %v1969
      %v1971 = vsub.s32 4294967266, %v1966
      %v1972 = vadd.s32 %v1971, 127
      %v1973 = vshll.u32 %v1972, 23
      %v1974 = vor.u32 4788187, %v1973
      %v1975 = vand.u32 2147483647, %v1974
      %v1977 = vcvt.s32.f32 %v1970
      %v1978 = vmul.f32 %v1977, %v1975
      %v1979 = vxor.u32 %v1978, 2147483648
      %v1980 = vsel %vm1897, %v1979, %v1978
      %v1981 = vsub.s32 4, %v1957
      %v1982 = vsel %vm1897, %v1981, %v1957
      %v1983 = vsel %vm1896, %v1317, %v1980
      %v1984 = vsel %vm1896, 0, %v1982
      %v1985 = vcosq.f32.pop %v1983
      %v1986 = vsinq.f32.pop %v1983
      %vm1987 = vweird.f32 %v1317
      %v1988 = vand.u32 %v1984, 3
      %vm1989 = vcmp.lt.s32.totalorder %v1988, 2
      %vm1990 = vcmp.eq.s32.totalorder %v1988, 0
      %v1991 = vxor.u32 %v1986, 2147483648
      %v1992 = vsel %vm1990, %v1985, %v1991
      %vm1993 = vcmp.eq.s32.totalorder %v1988, 2
      %v1994 = vxor.u32 %v1985, 2147483648
      %v1995 = vsel %vm1993, %v1994, %v1986
      %v1996 = vsel %vm1989, %v1992, %v1995
      %v1997 = vsel %vm1987, nan, %v1996
      %v1998 = vand.u32 2147483647, %v1323
      %vm1999 = vcmp.le.f32.partialorder %v1998, 0.7853982
      %vm2000 = vcmp.lt.s32.totalorder %v1323, 0
      %v2001 = vand.u32 %v1323, 2139095040
      %v2002 = vshrl.u32 %v2001, 23
      %v2003 = vsub.s32 %v2002, 127
      %v2004 = vand.u32 2147483647, %v1323
      %v2005 = vand.u32 %v2004, 8388607
      %v2006 = vor.u32 %v2005, 8388608
      %v2007 = vsub.s32 0, %v2006
      %v2008 = vadd.s32 %v2003, 1
      %vm2009 = vcmp.gt.s32.totalorder %v2008, 0
      %v2010 = vsel %vm2009, %v2008, 0
      %v2011 = vshrl.u32 %v2010, 5
      %v2012 = vand.u32 %v2010, 31
      %v2013 = vsub.s32 32, %v2012
      %v2014 = vshrl.u32 683565275, %v2013
      %v2015 = vshll.u32 683565275, %v2012
      %v2016 = vshrl.u32 2475754826, %v2013
      %v2017 = vor.u32 %v2015, %v2016
      %v2018 = vshll.u32 2475754826, %v2012
      %v2019 = vshrl.u32 2131351028, %v2013
      %v2020 = vor.u32 %v2018, %v2019
      %v2021 = vshll.u32 2131351028, %v2012
      %v2022 = vshrl.u32 2102212464, %v2013
      %v2023 = vor.u32 %v2021, %v2022
      %v2024 = vshll.u32 2102212464, %v2012
      %v2025 = vshrl.u32 920167782, %v2013
      %v2026 = vor.u32 %v2024, %v2025
      %v2027 = vshll.u32 920167782, %v2012
      %v2028 = vshrl.u32 1326507024, %v2013
      %v2029 = vor.u32 %v2027, %v2028
      %vm2030 = vcmp.lt.s32.totalorder %v2011, 1
      %vm2031 = vcmp.lt.s32.totalorder %v2011, 2
      %vm2032 = vcmp.lt.s32.totalorder %v2011, 3
      %vm2033 = vcmp.lt.s32.totalorder %v2011, 4
      %v2034 = vsel %vm2030, %v2014, %v2017
      %v2035 = vsel %vm2033, %v2023, 2102212464
      %v2036 = vsel %vm2032, %v2020, %v2035
      %v2037 = vsel %vm2031, %v2034, %v2036
      %v2038 = vsel %vm2030, %v2017, %v2020
      %v2039 = vsel %vm2033, %v2026, 920167782
      %v2040 = vsel %vm2032, %v2023, %v2039
      %v2041 = vsel %vm2031, %v2038, %v2040
      %v2042 = vsel %vm2030, %v2020, %v2023
      %v2043 = vsel %vm2033, %v2029, 1326507024
      %v2044 = vsel %vm2032, %v2026, %v2043
      %v2045 = vsel %vm2031, %v2042, %v2044
      %v2046 = vshll.u32 %v2006, 8
      %v2047 = vmul.u32.u64.compose %v2046, %v2045
      %v2048 = vextract.low.u32 %v2047
      %v2049 = vextract.high.u32 %v2047
      %v2050 = vmul.u32.u64.compose %v2046, %v2041
      %v2051 = vextract.low.u32 %v2050
      %v2052 = vextract.high.u32 %v2050
      %v2053 = vmul.u32 %v2046, %v2037
      %v2054 = vadd.s32 %v2049, %v2051
      %vm2055 = vc.u32 %v2049, %v2051
      %v2056 = vadd.s32 %v2052, 1
      %v2057 = vsel %vm2055, %v2056, %v2052
      %v2058 = vadd.s32 %v2053, %v2057
      %v2059 = vadd.s32 %v2058, 536870912
      %v2060 = vshrl.u32 %v2059, 30
      %v2061 = vshll.u32 %v2060, 30
      %v2062 = vsub.s32 %v2058, %v2061
      %vm2063 = vcmp.lt.s32.totalorder %v2062, 0
      %v2064 = vsub.s32 0, %v2062
      %v2065 = vsel %vm2063, %v2064, %v2062
      %v2066 = vclz %v2065
      %v2067 = vsub.s32 %v2066, 2
      %vm2068 = vcmp.gt.s32.totalorder 0, %v2067
      %v2069 = vsel %vm2068, 0, %v2067
      %v2070 = vsub.s32 32, %v2069
      %v2071 = vshll.u32 %v2062, %v2069
      %v2072 = vshrl.u32 %v2054, %v2070
      %v2073 = vor.u32 %v2071, %v2072
      %v2074 = vsub.s32 4294967266, %v2069
      %v2075 = vadd.s32 %v2074, 127
      %v2076 = vshll.u32 %v2075, 23
      %v2077 = vor.u32 4788187, %v2076
      %v2078 = vand.u32 2147483647, %v2077
      %v2080 = vcvt.s32.f32 %v2073
      %v2081 = vmul.f32 %v2080, %v2078
      %v2082 = vxor.u32 %v2081, 2147483648
      %v2083 = vsel %vm2000, %v2082, %v2081
      %v2084 = vsub.s32 4, %v2060
      %v2085 = vsel %vm2000, %v2084, %v2060
      %v2086 = vsel %vm1999, %v1323, %v2083
      %v2087 = vsel %vm1999, 0, %v2085
      %v2088 = vcosq.f32.pop %v2086
      %v2089 = vsinq.f32.pop %v2086
      %vm2090 = vweird.f32 %v1323
      %v2091 = vand.u32 %v2087, 3
      %vm2092 = vcmp.lt.s32.totalorder %v2091, 2
      %vm2093 = vcmp.eq.s32.totalorder %v2091, 0
      %v2094 = vxor.u32 %v2089, 2147483648
      %v2095 = vsel %vm2093, %v2088, %v2094
      %vm2096 = vcmp.eq.s32.totalorder %v2091, 2
      %v2097 = vxor.u32 %v2088, 2147483648
      %v2098 = vsel %vm2096, %v2097, %v2089
      %v2099 = vsel %vm2092, %v2095, %v2098
      %v2100 = vsel %vm2090, nan, %v2099
      %v2101 = vand.u32 2147483647, %v1329
      %vm2102 = vcmp.le.f32.partialorder %v2101, 0.7853982
      %vm2103 = vcmp.lt.s32.totalorder %v1329, 0
      %v2104 = vand.u32 %v1329, 2139095040
      %v2105 = vshrl.u32 %v2104, 23
      %v2106 = vsub.s32 %v2105, 127
      %v2107 = vand.u32 2147483647, %v1329
      %v2108 = vand.u32 %v2107, 8388607
      %v2109 = vor.u32 %v2108, 8388608
      %v2110 = vsub.s32 0, %v2109
      %v2111 = vadd.s32 %v2106, 1
      %vm2112 = vcmp.gt.s32.totalorder %v2111, 0
      %v2113 = vsel %vm2112, %v2111, 0
      %v2114 = vshrl.u32 %v2113, 5
      %v2115 = vand.u32 %v2113, 31
      %v2116 = vsub.s32 32, %v2115
      %v2117 = vshrl.u32 683565275, %v2116
      %v2118 = vshll.u32 683565275, %v2115
      %v2119 = vshrl.u32 2475754826, %v2116
      %v2120 = vor.u32 %v2118, %v2119
      %v2121 = vshll.u32 2475754826, %v2115
      %v2122 = vshrl.u32 2131351028, %v2116
      %v2123 = vor.u32 %v2121, %v2122
      %v2124 = vshll.u32 2131351028, %v2115
      %v2125 = vshrl.u32 2102212464, %v2116
      %v2126 = vor.u32 %v2124, %v2125
      %v2127 = vshll.u32 2102212464, %v2115
      %v2128 = vshrl.u32 920167782, %v2116
      %v2129 = vor.u32 %v2127, %v2128
      %v2130 = vshll.u32 920167782, %v2115
      %v2131 = vshrl.u32 1326507024, %v2116
      %v2132 = vor.u32 %v2130, %v2131
      %vm2133 = vcmp.lt.s32.totalorder %v2114, 1
      %vm2134 = vcmp.lt.s32.totalorder %v2114, 2
      %vm2135 = vcmp.lt.s32.totalorder %v2114, 3
      %vm2136 = vcmp.lt.s32.totalorder %v2114, 4
      %v2137 = vsel %vm2133, %v2117, %v2120
      %v2138 = vsel %vm2136, %v2126, 2102212464
      %v2139 = vsel %vm2135, %v2123, %v2138
      %v2140 = vsel %vm2134, %v2137, %v2139
      %v2141 = vsel %vm2133, %v2120, %v2123
      %v2142 = vsel %vm2136, %v2129, 920167782
      %v2143 = vsel %vm2135, %v2126, %v2142
      %v2144 = vsel %vm2134, %v2141, %v2143
      %v2145 = vsel %vm2133, %v2123, %v2126
      %v2146 = vsel %vm2136, %v2132, 1326507024
      %v2147 = vsel %vm2135, %v2129, %v2146
      %v2148 = vsel %vm2134, %v2145, %v2147
      %v2149 = vshll.u32 %v2109, 8
      %v2150 = vmul.u32.u64.compose %v2149, %v2148
      %v2151 = vextract.low.u32 %v2150
      %v2152 = vextract.high.u32 %v2150
      %v2153 = vmul.u32.u64.compose %v2149, %v2144
      %v2154 = vextract.low.u32 %v2153
      %v2155 = vextract.high.u32 %v2153
      %v2156 = vmul.u32 %v2149, %v2140
      %v2157 = vadd.s32 %v2152, %v2154
      %vm2158 = vc.u32 %v2152, %v2154
      %v2159 = vadd.s32 %v2155, 1
      %v2160 = vsel %vm2158, %v2159, %v2155
      %v2161 = vadd.s32 %v2156, %v2160
      %v2162 = vadd.s32 %v2161, 536870912
      %v2163 = vshrl.u32 %v2162, 30
      %v2164 = vshll.u32 %v2163, 30
      %v2165 = vsub.s32 %v2161, %v2164
      %vm2166 = vcmp.lt.s32.totalorder %v2165, 0
      %v2167 = vsub.s32 0, %v2165
      %v2168 = vsel %vm2166, %v2167, %v2165
      %v2169 = vclz %v2168
      %v2170 = vsub.s32 %v2169, 2
      %vm2171 = vcmp.gt.s32.totalorder 0, %v2170
      %v2172 = vsel %vm2171, 0, %v2170
      %v2173 = vsub.s32 32, %v2172
      %v2174 = vshll.u32 %v2165, %v2172
      %v2175 = vshrl.u32 %v2157, %v2173
      %v2176 = vor.u32 %v2174, %v2175
      %v2177 = vsub.s32 4294967266, %v2172
      %v2178 = vadd.s32 %v2177, 127
      %v2179 = vshll.u32 %v2178, 23
      %v2180 = vor.u32 4788187, %v2179
      %v2181 = vand.u32 2147483647, %v2180
      %v2183 = vcvt.s32.f32 %v2176
      %v2184 = vmul.f32 %v2183, %v2181
      %v2185 = vxor.u32 %v2184, 2147483648
      %v2186 = vsel %vm2103, %v2185, %v2184
      %v2187 = vsub.s32 4, %v2163
      %v2188 = vsel %vm2103, %v2187, %v2163
      %v2189 = vsel %vm2102, %v1329, %v2186
      %v2190 = vsel %vm2102, 0, %v2188
      %v2191 = vcosq.f32.pop %v2189
      %v2192 = vsinq.f32.pop %v2189
      %vm2193 = vweird.f32 %v1329
      %v2194 = vand.u32 %v2190, 3
      %vm2195 = vcmp.lt.s32.totalorder %v2194, 2
      %vm2196 = vcmp.eq.s32.totalorder %v2194, 0
      %v2197 = vxor.u32 %v2192, 2147483648
      %v2198 = vsel %vm2196, %v2191, %v2197
      %vm2199 = vcmp.eq.s32.totalorder %v2194, 2
      %v2200 = vxor.u32 %v2191, 2147483648
      %v2201 = vsel %vm2199, %v2200, %v2192
      %v2202 = vsel %vm2195, %v2198, %v2201
      %v2203 = vsel %vm2193, nan, %v2202
      %v2204 = vand.u32 2147483647, %v1335
      %vm2205 = vcmp.le.f32.partialorder %v2204, 0.7853982
      %vm2206 = vcmp.lt.s32.totalorder %v1335, 0
      %v2207 = vand.u32 %v1335, 2139095040
      %v2208 = vshrl.u32 %v2207, 23
      %v2209 = vsub.s32 %v2208, 127
      %v2210 = vand.u32 2147483647, %v1335
      %v2211 = vand.u32 %v2210, 8388607
      %v2212 = vor.u32 %v2211, 8388608
      %v2213 = vsub.s32 0, %v2212
      %v2214 = vadd.s32 %v2209, 1
      %vm2215 = vcmp.gt.s32.totalorder %v2214, 0
      %v2216 = vsel %vm2215, %v2214, 0
      %v2217 = vshrl.u32 %v2216, 5
      %v2218 = vand.u32 %v2216, 31
      %v2219 = vsub.s32 32, %v2218
      %v2220 = vshrl.u32 683565275, %v2219
      %v2221 = vshll.u32 683565275, %v2218
      %v2222 = vshrl.u32 2475754826, %v2219
      %v2223 = vor.u32 %v2221, %v2222
      %v2224 = vshll.u32 2475754826, %v2218
      %v2225 = vshrl.u32 2131351028, %v2219
      %v2226 = vor.u32 %v2224, %v2225
      %v2227 = vshll.u32 2131351028, %v2218
      %v2228 = vshrl.u32 2102212464, %v2219
      %v2229 = vor.u32 %v2227, %v2228
      %v2230 = vshll.u32 2102212464, %v2218
      %v2231 = vshrl.u32 920167782, %v2219
      %v2232 = vor.u32 %v2230, %v2231
      %v2233 = vshll.u32 920167782, %v2218
      %v2234 = vshrl.u32 1326507024, %v2219
      %v2235 = vor.u32 %v2233, %v2234
      %vm2236 = vcmp.lt.s32.totalorder %v2217, 1
      %vm2237 = vcmp.lt.s32.totalorder %v2217, 2
      %vm2238 = vcmp.lt.s32.totalorder %v2217, 3
      %vm2239 = vcmp.lt.s32.totalorder %v2217, 4
      %v2240 = vsel %vm2236, %v2220, %v2223
      %v2241 = vsel %vm2239, %v2229, 2102212464
      %v2242 = vsel %vm2238, %v2226, %v2241
      %v2243 = vsel %vm2237, %v2240, %v2242
      %v2244 = vsel %vm2236, %v2223, %v2226
      %v2245 = vsel %vm2239, %v2232, 920167782
      %v2246 = vsel %vm2238, %v2229, %v2245
      %v2247 = vsel %vm2237, %v2244, %v2246
      %v2248 = vsel %vm2236, %v2226, %v2229
      %v2249 = vsel %vm2239, %v2235, 1326507024
      %v2250 = vsel %vm2238, %v2232, %v2249
      %v2251 = vsel %vm2237, %v2248, %v2250
      %v2252 = vshll.u32 %v2212, 8
      %v2253 = vmul.u32.u64.compose %v2252, %v2251
      %v2254 = vextract.low.u32 %v2253
      %v2255 = vextract.high.u32 %v2253
      %v2256 = vmul.u32.u64.compose %v2252, %v2247
      %v2257 = vextract.low.u32 %v2256
      %v2258 = vextract.high.u32 %v2256
      %v2259 = vmul.u32 %v2252, %v2243
      %v2260 = vadd.s32 %v2255, %v2257
      %vm2261 = vc.u32 %v2255, %v2257
      %v2262 = vadd.s32 %v2258, 1
      %v2263 = vsel %vm2261, %v2262, %v2258
      %v2264 = vadd.s32 %v2259, %v2263
      %v2265 = vadd.s32 %v2264, 536870912
      %v2266 = vshrl.u32 %v2265, 30
      %v2267 = vshll.u32 %v2266, 30
      %v2268 = vsub.s32 %v2264, %v2267
      %vm2269 = vcmp.lt.s32.totalorder %v2268, 0
      %v2270 = vsub.s32 0, %v2268
      %v2271 = vsel %vm2269, %v2270, %v2268
      %v2272 = vclz %v2271
      %v2273 = vsub.s32 %v2272, 2
      %vm2274 = vcmp.gt.s32.totalorder 0, %v2273
      %v2275 = vsel %vm2274, 0, %v2273
      %v2276 = vsub.s32 32, %v2275
      %v2277 = vshll.u32 %v2268, %v2275
      %v2278 = vshrl.u32 %v2260, %v2276
      %v2279 = vor.u32 %v2277, %v2278
      %v2280 = vsub.s32 4294967266, %v2275
      %v2281 = vadd.s32 %v2280, 127
      %v2282 = vshll.u32 %v2281, 23
      %v2283 = vor.u32 4788187, %v2282
      %v2284 = vand.u32 2147483647, %v2283
      %v2286 = vcvt.s32.f32 %v2279
      %v2287 = vmul.f32 %v2286, %v2284
      %v2288 = vxor.u32 %v2287, 2147483648
      %v2289 = vsel %vm2206, %v2288, %v2287
      %v2290 = vsub.s32 4, %v2266
      %v2291 = vsel %vm2206, %v2290, %v2266
      %v2292 = vsel %vm2205, %v1335, %v2289
      %v2293 = vsel %vm2205, 0, %v2291
      %v2294 = vcosq.f32.pop %v2292
      %v2295 = vsinq.f32.pop %v2292
      %vm2296 = vweird.f32 %v1335
      %v2297 = vand.u32 %v2293, 3
      %vm2298 = vcmp.lt.s32.totalorder %v2297, 2
      %vm2299 = vcmp.eq.s32.totalorder %v2297, 0
      %v2300 = vxor.u32 %v2295, 2147483648
      %v2301 = vsel %vm2299, %v2294, %v2300
      %vm2302 = vcmp.eq.s32.totalorder %v2297, 2
      %v2303 = vxor.u32 %v2294, 2147483648
      %v2304 = vsel %vm2302, %v2303, %v2295
      %v2305 = vsel %vm2298, %v2301, %v2304
      %v2306 = vsel %vm2296, nan, %v2305
      %v2307 = vand.u32 2147483647, %v1341
      %vm2308 = vcmp.le.f32.partialorder %v2307, 0.7853982
      %vm2309 = vcmp.lt.s32.totalorder %v1341, 0
      %v2310 = vand.u32 %v1341, 2139095040
      %v2311 = vshrl.u32 %v2310, 23
      %v2312 = vsub.s32 %v2311, 127
      %v2313 = vand.u32 2147483647, %v1341
      %v2314 = vand.u32 %v2313, 8388607
      %v2315 = vor.u32 %v2314, 8388608
      %v2316 = vsub.s32 0, %v2315
      %v2317 = vadd.s32 %v2312, 1
      %vm2318 = vcmp.gt.s32.totalorder %v2317, 0
      %v2319 = vsel %vm2318, %v2317, 0
      %v2320 = vshrl.u32 %v2319, 5
      %v2321 = vand.u32 %v2319, 31
      %v2322 = vsub.s32 32, %v2321
      %v2323 = vshrl.u32 683565275, %v2322
      %v2324 = vshll.u32 683565275, %v2321
      %v2325 = vshrl.u32 2475754826, %v2322
      %v2326 = vor.u32 %v2324, %v2325
      %v2327 = vshll.u32 2475754826, %v2321
      %v2328 = vshrl.u32 2131351028, %v2322
      %v2329 = vor.u32 %v2327, %v2328
      %v2330 = vshll.u32 2131351028, %v2321
      %v2331 = vshrl.u32 2102212464, %v2322
      %v2332 = vor.u32 %v2330, %v2331
      %v2333 = vshll.u32 2102212464, %v2321
      %v2334 = vshrl.u32 920167782, %v2322
      %v2335 = vor.u32 %v2333, %v2334
      %v2336 = vshll.u32 920167782, %v2321
      %v2337 = vshrl.u32 1326507024, %v2322
      %v2338 = vor.u32 %v2336, %v2337
      %vm2339 = vcmp.lt.s32.totalorder %v2320, 1
      %vm2340 = vcmp.lt.s32.totalorder %v2320, 2
      %vm2341 = vcmp.lt.s32.totalorder %v2320, 3
      %vm2342 = vcmp.lt.s32.totalorder %v2320, 4
      %v2343 = vsel %vm2339, %v2323, %v2326
      %v2344 = vsel %vm2342, %v2332, 2102212464
      %v2345 = vsel %vm2341, %v2329, %v2344
      %v2346 = vsel %vm2340, %v2343, %v2345
      %v2347 = vsel %vm2339, %v2326, %v2329
      %v2348 = vsel %vm2342, %v2335, 920167782
      %v2349 = vsel %vm2341, %v2332, %v2348
      %v2350 = vsel %vm2340, %v2347, %v2349
      %v2351 = vsel %vm2339, %v2329, %v2332
      %v2352 = vsel %vm2342, %v2338, 1326507024
      %v2353 = vsel %vm2341, %v2335, %v2352
      %v2354 = vsel %vm2340, %v2351, %v2353
      %v2355 = vshll.u32 %v2315, 8
      %v2356 = vmul.u32.u64.compose %v2355, %v2354
      %v2357 = vextract.low.u32 %v2356
      %v2358 = vextract.high.u32 %v2356
      %v2359 = vmul.u32.u64.compose %v2355, %v2350
      %v2360 = vextract.low.u32 %v2359
      %v2361 = vextract.high.u32 %v2359
      %v2362 = vmul.u32 %v2355, %v2346
      %v2363 = vadd.s32 %v2358, %v2360
      %vm2364 = vc.u32 %v2358, %v2360
      %v2365 = vadd.s32 %v2361, 1
      %v2366 = vsel %vm2364, %v2365, %v2361
      %v2367 = vadd.s32 %v2362, %v2366
      %v2368 = vadd.s32 %v2367, 536870912
      %v2369 = vshrl.u32 %v2368, 30
      %v2370 = vshll.u32 %v2369, 30
      %v2371 = vsub.s32 %v2367, %v2370
      %vm2372 = vcmp.lt.s32.totalorder %v2371, 0
      %v2373 = vsub.s32 0, %v2371
      %v2374 = vsel %vm2372, %v2373, %v2371
      %v2375 = vclz %v2374
      %v2376 = vsub.s32 %v2375, 2
      %vm2377 = vcmp.gt.s32.totalorder 0, %v2376
      %v2378 = vsel %vm2377, 0, %v2376
      %v2379 = vsub.s32 32, %v2378
      %v2380 = vshll.u32 %v2371, %v2378
      %v2381 = vshrl.u32 %v2363, %v2379
      %v2382 = vor.u32 %v2380, %v2381
      %v2383 = vsub.s32 4294967266, %v2378
      %v2384 = vadd.s32 %v2383, 127
      %v2385 = vshll.u32 %v2384, 23
      %v2386 = vor.u32 4788187, %v2385
      %v2387 = vand.u32 2147483647, %v2386
      %v2389 = vcvt.s32.f32 %v2382
      %v2390 = vmul.f32 %v2389, %v2387
      %v2391 = vxor.u32 %v2390, 2147483648
      %v2392 = vsel %vm2309, %v2391, %v2390
      %v2393 = vsub.s32 4, %v2369
      %v2394 = vsel %vm2309, %v2393, %v2369
      %v2395 = vsel %vm2308, %v1341, %v2392
      %v2396 = vsel %vm2308, 0, %v2394
      %v2397 = vcosq.f32.pop %v2395
      %v2398 = vsinq.f32.pop %v2395
      %vm2399 = vweird.f32 %v1341
      %v2400 = vand.u32 %v2396, 3
      %vm2401 = vcmp.lt.s32.totalorder %v2400, 2
      %vm2402 = vcmp.eq.s32.totalorder %v2400, 0
      %v2403 = vxor.u32 %v2398, 2147483648
      %v2404 = vsel %vm2402, %v2397, %v2403
      %vm2405 = vcmp.eq.s32.totalorder %v2400, 2
      %v2406 = vxor.u32 %v2397, 2147483648
      %v2407 = vsel %vm2405, %v2406, %v2398
      %v2408 = vsel %vm2401, %v2404, %v2407
      %v2409 = vsel %vm2399, nan, %v2408
      %v2410 = vand.u32 2147483647, %v1347
      %vm2411 = vcmp.le.f32.partialorder %v2410, 0.7853982
      %vm2412 = vcmp.lt.s32.totalorder %v1347, 0
      %v2413 = vand.u32 %v1347, 2139095040
      %v2414 = vshrl.u32 %v2413, 23
      %v2415 = vsub.s32 %v2414, 127
      %v2416 = vand.u32 2147483647, %v1347
      %v2417 = vand.u32 %v2416, 8388607
      %v2418 = vor.u32 %v2417, 8388608
      %v2419 = vsub.s32 0, %v2418
      %v2420 = vadd.s32 %v2415, 1
      %vm2421 = vcmp.gt.s32.totalorder %v2420, 0
      %v2422 = vsel %vm2421, %v2420, 0
      %v2423 = vshrl.u32 %v2422, 5
      %v2424 = vand.u32 %v2422, 31
      %v2425 = vsub.s32 32, %v2424
      %v2426 = vshrl.u32 683565275, %v2425
      %v2427 = vshll.u32 683565275, %v2424
      %v2428 = vshrl.u32 2475754826, %v2425
      %v2429 = vor.u32 %v2427, %v2428
      %v2430 = vshll.u32 2475754826, %v2424
      %v2431 = vshrl.u32 2131351028, %v2425
      %v2432 = vor.u32 %v2430, %v2431
      %v2433 = vshll.u32 2131351028, %v2424
      %v2434 = vshrl.u32 2102212464, %v2425
      %v2435 = vor.u32 %v2433, %v2434
      %v2436 = vshll.u32 2102212464, %v2424
      %v2437 = vshrl.u32 920167782, %v2425
      %v2438 = vor.u32 %v2436, %v2437
      %v2439 = vshll.u32 920167782, %v2424
      %v2440 = vshrl.u32 1326507024, %v2425
      %v2441 = vor.u32 %v2439, %v2440
      %vm2442 = vcmp.lt.s32.totalorder %v2423, 1
      %vm2443 = vcmp.lt.s32.totalorder %v2423, 2
      %vm2444 = vcmp.lt.s32.totalorder %v2423, 3
      %vm2445 = vcmp.lt.s32.totalorder %v2423, 4
      %v2446 = vsel %vm2442, %v2426, %v2429
      %v2447 = vsel %vm2445, %v2435, 2102212464
      %v2448 = vsel %vm2444, %v2432, %v2447
      %v2449 = vsel %vm2443, %v2446, %v2448
      %v2450 = vsel %vm2442, %v2429, %v2432
      %v2451 = vsel %vm2445, %v2438, 920167782
      %v2452 = vsel %vm2444, %v2435, %v2451
      %v2453 = vsel %vm2443, %v2450, %v2452
      %v2454 = vsel %vm2442, %v2432, %v2435
      %v2455 = vsel %vm2445, %v2441, 1326507024
      %v2456 = vsel %vm2444, %v2438, %v2455
      %v2457 = vsel %vm2443, %v2454, %v2456
      %v2458 = vshll.u32 %v2418, 8
      %v2459 = vmul.u32.u64.compose %v2458, %v2457
      %v2460 = vextract.low.u32 %v2459
      %v2461 = vextract.high.u32 %v2459
      %v2462 = vmul.u32.u64.compose %v2458, %v2453
      %v2463 = vextract.low.u32 %v2462
      %v2464 = vextract.high.u32 %v2462
      %v2465 = vmul.u32 %v2458, %v2449
      %v2466 = vadd.s32 %v2461, %v2463
      %vm2467 = vc.u32 %v2461, %v2463
      %v2468 = vadd.s32 %v2464, 1
      %v2469 = vsel %vm2467, %v2468, %v2464
      %v2470 = vadd.s32 %v2465, %v2469
      %v2471 = vadd.s32 %v2470, 536870912
      %v2472 = vshrl.u32 %v2471, 30
      %v2473 = vshll.u32 %v2472, 30
      %v2474 = vsub.s32 %v2470, %v2473
      %vm2475 = vcmp.lt.s32.totalorder %v2474, 0
      %v2476 = vsub.s32 0, %v2474
      %v2477 = vsel %vm2475, %v2476, %v2474
      %v2478 = vclz %v2477
      %v2479 = vsub.s32 %v2478, 2
      %vm2480 = vcmp.gt.s32.totalorder 0, %v2479
      %v2481 = vsel %vm2480, 0, %v2479
      %v2482 = vsub.s32 32, %v2481
      %v2483 = vshll.u32 %v2474, %v2481
      %v2484 = vshrl.u32 %v2466, %v2482
      %v2485 = vor.u32 %v2483, %v2484
      %v2486 = vsub.s32 4294967266, %v2481
      %v2487 = vadd.s32 %v2486, 127
      %v2488 = vshll.u32 %v2487, 23
      %v2489 = vor.u32 4788187, %v2488
      %v2490 = vand.u32 2147483647, %v2489
      %v2492 = vcvt.s32.f32 %v2485
      %v2493 = vmul.f32 %v2492, %v2490
      %v2494 = vxor.u32 %v2493, 2147483648
      %v2495 = vsel %vm2412, %v2494, %v2493
      %v2496 = vsub.s32 4, %v2472
      %v2497 = vsel %vm2412, %v2496, %v2472
      %v2498 = vsel %vm2411, %v1347, %v2495
      %v2499 = vsel %vm2411, 0, %v2497
      %v2500 = vcosq.f32.pop %v2498
      %v2501 = vsinq.f32.pop %v2498
      %vm2502 = vweird.f32 %v1347
      %v2503 = vand.u32 %v2499, 3
      %vm2504 = vcmp.lt.s32.totalorder %v2503, 2
      %vm2505 = vcmp.eq.s32.totalorder %v2503, 0
      %v2506 = vxor.u32 %v2501, 2147483648
      %v2507 = vsel %vm2505, %v2500, %v2506
      %vm2508 = vcmp.eq.s32.totalorder %v2503, 2
      %v2509 = vxor.u32 %v2500, 2147483648
      %v2510 = vsel %vm2508, %v2509, %v2501
      %v2511 = vsel %vm2504, %v2507, %v2510
      %v2512 = vsel %vm2502, nan, %v2511
      %v2513 = vand.u32 2147483647, %v1353
      %vm2514 = vcmp.le.f32.partialorder %v2513, 0.7853982
      %vm2515 = vcmp.lt.s32.totalorder %v1353, 0
      %v2516 = vand.u32 %v1353, 2139095040
      %v2517 = vshrl.u32 %v2516, 23
      %v2518 = vsub.s32 %v2517, 127
      %v2519 = vand.u32 2147483647, %v1353
      %v2520 = vand.u32 %v2519, 8388607
      %v2521 = vor.u32 %v2520, 8388608
      %v2522 = vsub.s32 0, %v2521
      %v2523 = vadd.s32 %v2518, 1
      %vm2524 = vcmp.gt.s32.totalorder %v2523, 0
      %v2525 = vsel %vm2524, %v2523, 0
      %v2526 = vshrl.u32 %v2525, 5
      %v2527 = vand.u32 %v2525, 31
      %v2528 = vsub.s32 32, %v2527
      %v2529 = vshrl.u32 683565275, %v2528
      %v2530 = vshll.u32 683565275, %v2527
      %v2531 = vshrl.u32 2475754826, %v2528
      %v2532 = vor.u32 %v2530, %v2531
      %v2533 = vshll.u32 2475754826, %v2527
      %v2534 = vshrl.u32 2131351028, %v2528
      %v2535 = vor.u32 %v2533, %v2534
      %v2536 = vshll.u32 2131351028, %v2527
      %v2537 = vshrl.u32 2102212464, %v2528
      %v2538 = vor.u32 %v2536, %v2537
      %v2539 = vshll.u32 2102212464, %v2527
      %v2540 = vshrl.u32 920167782, %v2528
      %v2541 = vor.u32 %v2539, %v2540
      %v2542 = vshll.u32 920167782, %v2527
      %v2543 = vshrl.u32 1326507024, %v2528
      %v2544 = vor.u32 %v2542, %v2543
      %vm2545 = vcmp.lt.s32.totalorder %v2526, 1
      %vm2546 = vcmp.lt.s32.totalorder %v2526, 2
      %vm2547 = vcmp.lt.s32.totalorder %v2526, 3
      %vm2548 = vcmp.lt.s32.totalorder %v2526, 4
      %v2549 = vsel %vm2545, %v2529, %v2532
      %v2550 = vsel %vm2548, %v2538, 2102212464
      %v2551 = vsel %vm2547, %v2535, %v2550
      %v2552 = vsel %vm2546, %v2549, %v2551
      %v2553 = vsel %vm2545, %v2532, %v2535
      %v2554 = vsel %vm2548, %v2541, 920167782
      %v2555 = vsel %vm2547, %v2538, %v2554
      %v2556 = vsel %vm2546, %v2553, %v2555
      %v2557 = vsel %vm2545, %v2535, %v2538
      %v2558 = vsel %vm2548, %v2544, 1326507024
      %v2559 = vsel %vm2547, %v2541, %v2558
      %v2560 = vsel %vm2546, %v2557, %v2559
      %v2561 = vshll.u32 %v2521, 8
      %v2562 = vmul.u32.u64.compose %v2561, %v2560
      %v2563 = vextract.low.u32 %v2562
      %v2564 = vextract.high.u32 %v2562
      %v2565 = vmul.u32.u64.compose %v2561, %v2556
      %v2566 = vextract.low.u32 %v2565
      %v2567 = vextract.high.u32 %v2565
      %v2568 = vmul.u32 %v2561, %v2552
      %v2569 = vadd.s32 %v2564, %v2566
      %vm2570 = vc.u32 %v2564, %v2566
      %v2571 = vadd.s32 %v2567, 1
      %v2572 = vsel %vm2570, %v2571, %v2567
      %v2573 = vadd.s32 %v2568, %v2572
      %v2574 = vadd.s32 %v2573, 536870912
      %v2575 = vshrl.u32 %v2574, 30
      %v2576 = vshll.u32 %v2575, 30
      %v2577 = vsub.s32 %v2573, %v2576
      %vm2578 = vcmp.lt.s32.totalorder %v2577, 0
      %v2579 = vsub.s32 0, %v2577
      %v2580 = vsel %vm2578, %v2579, %v2577
      %v2581 = vclz %v2580
      %v2582 = vsub.s32 %v2581, 2
      %vm2583 = vcmp.gt.s32.totalorder 0, %v2582
      %v2584 = vsel %vm2583, 0, %v2582
      %v2585 = vsub.s32 32, %v2584
      %v2586 = vshll.u32 %v2577, %v2584
      %v2587 = vshrl.u32 %v2569, %v2585
      %v2588 = vor.u32 %v2586, %v2587
      %v2589 = vsub.s32 4294967266, %v2584
      %v2590 = vadd.s32 %v2589, 127
      %v2591 = vshll.u32 %v2590, 23
      %v2592 = vor.u32 4788187, %v2591
      %v2593 = vand.u32 2147483647, %v2592
      %v2595 = vcvt.s32.f32 %v2588
      %v2596 = vmul.f32 %v2595, %v2593
      %v2597 = vxor.u32 %v2596, 2147483648
      %v2598 = vsel %vm2515, %v2597, %v2596
      %v2599 = vsub.s32 4, %v2575
      %v2600 = vsel %vm2515, %v2599, %v2575
      %v2601 = vsel %vm2514, %v1353, %v2598
      %v2602 = vsel %vm2514, 0, %v2600
      %v2603 = vcosq.f32.pop %v2601
      %v2604 = vsinq.f32.pop %v2601
      %vm2605 = vweird.f32 %v1353
      %v2606 = vand.u32 %v2602, 3
      %vm2607 = vcmp.lt.s32.totalorder %v2606, 2
      %vm2608 = vcmp.eq.s32.totalorder %v2606, 0
      %v2609 = vxor.u32 %v2604, 2147483648
      %v2610 = vsel %vm2608, %v2603, %v2609
      %vm2611 = vcmp.eq.s32.totalorder %v2606, 2
      %v2612 = vxor.u32 %v2603, 2147483648
      %v2613 = vsel %vm2611, %v2612, %v2604
      %v2614 = vsel %vm2607, %v2610, %v2613
      %v2615 = vsel %vm2605, nan, %v2614
      %v2616 = vand.u32 2147483647, %v1359
      %vm2617 = vcmp.le.f32.partialorder %v2616, 0.7853982
      %vm2618 = vcmp.lt.s32.totalorder %v1359, 0
      %v2619 = vand.u32 %v1359, 2139095040
      %v2620 = vshrl.u32 %v2619, 23
      %v2621 = vsub.s32 %v2620, 127
      %v2622 = vand.u32 2147483647, %v1359
      %v2623 = vand.u32 %v2622, 8388607
      %v2624 = vor.u32 %v2623, 8388608
      %v2625 = vsub.s32 0, %v2624
      %v2626 = vadd.s32 %v2621, 1
      %vm2627 = vcmp.gt.s32.totalorder %v2626, 0
      %v2628 = vsel %vm2627, %v2626, 0
      %v2629 = vshrl.u32 %v2628, 5
      %v2630 = vand.u32 %v2628, 31
      %v2631 = vsub.s32 32, %v2630
      %v2632 = vshrl.u32 683565275, %v2631
      %v2633 = vshll.u32 683565275, %v2630
      %v2634 = vshrl.u32 2475754826, %v2631
      %v2635 = vor.u32 %v2633, %v2634
      %v2636 = vshll.u32 2475754826, %v2630
      %v2637 = vshrl.u32 2131351028, %v2631
      %v2638 = vor.u32 %v2636, %v2637
      %v2639 = vshll.u32 2131351028, %v2630
      %v2640 = vshrl.u32 2102212464, %v2631
      %v2641 = vor.u32 %v2639, %v2640
      %v2642 = vshll.u32 2102212464, %v2630
      %v2643 = vshrl.u32 920167782, %v2631
      %v2644 = vor.u32 %v2642, %v2643
      %v2645 = vshll.u32 920167782, %v2630
      %v2646 = vshrl.u32 1326507024, %v2631
      %v2647 = vor.u32 %v2645, %v2646
      %vm2648 = vcmp.lt.s32.totalorder %v2629, 1
      %vm2649 = vcmp.lt.s32.totalorder %v2629, 2
      %vm2650 = vcmp.lt.s32.totalorder %v2629, 3
      %vm2651 = vcmp.lt.s32.totalorder %v2629, 4
      %v2652 = vsel %vm2648, %v2632, %v2635
      %v2653 = vsel %vm2651, %v2641, 2102212464
      %v2654 = vsel %vm2650, %v2638, %v2653
      %v2655 = vsel %vm2649, %v2652, %v2654
      %v2656 = vsel %vm2648, %v2635, %v2638
      %v2657 = vsel %vm2651, %v2644, 920167782
      %v2658 = vsel %vm2650, %v2641, %v2657
      %v2659 = vsel %vm2649, %v2656, %v2658
      %v2660 = vsel %vm2648, %v2638, %v2641
      %v2661 = vsel %vm2651, %v2647, 1326507024
      %v2662 = vsel %vm2650, %v2644, %v2661
      %v2663 = vsel %vm2649, %v2660, %v2662
      %v2664 = vshll.u32 %v2624, 8
      %v2665 = vmul.u32.u64.compose %v2664, %v2663
      %v2666 = vextract.low.u32 %v2665
      %v2667 = vextract.high.u32 %v2665
      %v2668 = vmul.u32.u64.compose %v2664, %v2659
      %v2669 = vextract.low.u32 %v2668
      %v2670 = vextract.high.u32 %v2668
      %v2671 = vmul.u32 %v2664, %v2655
      %v2672 = vadd.s32 %v2667, %v2669
      %vm2673 = vc.u32 %v2667, %v2669
      %v2674 = vadd.s32 %v2670, 1
      %v2675 = vsel %vm2673, %v2674, %v2670
      %v2676 = vadd.s32 %v2671, %v2675
      %v2677 = vadd.s32 %v2676, 536870912
      %v2678 = vshrl.u32 %v2677, 30
      %v2679 = vshll.u32 %v2678, 30
      %v2680 = vsub.s32 %v2676, %v2679
      %vm2681 = vcmp.lt.s32.totalorder %v2680, 0
      %v2682 = vsub.s32 0, %v2680
      %v2683 = vsel %vm2681, %v2682, %v2680
      %v2684 = vclz %v2683
      %v2685 = vsub.s32 %v2684, 2
      %vm2686 = vcmp.gt.s32.totalorder 0, %v2685
      %v2687 = vsel %vm2686, 0, %v2685
      %v2688 = vsub.s32 32, %v2687
      %v2689 = vshll.u32 %v2680, %v2687
      %v2690 = vshrl.u32 %v2672, %v2688
      %v2691 = vor.u32 %v2689, %v2690
      %v2692 = vsub.s32 4294967266, %v2687
      %v2693 = vadd.s32 %v2692, 127
      %v2694 = vshll.u32 %v2693, 23
      %v2695 = vor.u32 4788187, %v2694
      %v2696 = vand.u32 2147483647, %v2695
      %v2698 = vcvt.s32.f32 %v2691
      %v2699 = vmul.f32 %v2698, %v2696
      %v2700 = vxor.u32 %v2699, 2147483648
      %v2701 = vsel %vm2618, %v2700, %v2699
      %v2702 = vsub.s32 4, %v2678
      %v2703 = vsel %vm2618, %v2702, %v2678
      %v2704 = vsel %vm2617, %v1359, %v2701
      %v2705 = vsel %vm2617, 0, %v2703
      %v2706 = vcosq.f32.pop %v2704
      %v2707 = vsinq.f32.pop %v2704
      %vm2708 = vweird.f32 %v1359
      %v2709 = vand.u32 %v2705, 3
      %vm2710 = vcmp.lt.s32.totalorder %v2709, 2
      %vm2711 = vcmp.eq.s32.totalorder %v2709, 0
      %v2712 = vxor.u32 %v2707, 2147483648
      %v2713 = vsel %vm2711, %v2706, %v2712
      %vm2714 = vcmp.eq.s32.totalorder %v2709, 2
      %v2715 = vxor.u32 %v2706, 2147483648
      %v2716 = vsel %vm2714, %v2715, %v2707
      %v2717 = vsel %vm2710, %v2713, %v2716
      %v2718 = vsel %vm2708, nan, %v2717
      %v2719 = vand.u32 2147483647, %v1365
      %vm2720 = vcmp.le.f32.partialorder %v2719, 0.7853982
      %vm2721 = vcmp.lt.s32.totalorder %v1365, 0
      %v2722 = vand.u32 %v1365, 2139095040
      %v2723 = vshrl.u32 %v2722, 23
      %v2724 = vsub.s32 %v2723, 127
      %v2725 = vand.u32 2147483647, %v1365
      %v2726 = vand.u32 %v2725, 8388607
      %v2727 = vor.u32 %v2726, 8388608
      %v2728 = vsub.s32 0, %v2727
      %v2729 = vadd.s32 %v2724, 1
      %vm2730 = vcmp.gt.s32.totalorder %v2729, 0
      %v2731 = vsel %vm2730, %v2729, 0
      %v2732 = vshrl.u32 %v2731, 5
      %v2733 = vand.u32 %v2731, 31
      %v2734 = vsub.s32 32, %v2733
      %v2735 = vshrl.u32 683565275, %v2734
      %v2736 = vshll.u32 683565275, %v2733
      %v2737 = vshrl.u32 2475754826, %v2734
      %v2738 = vor.u32 %v2736, %v2737
      %v2739 = vshll.u32 2475754826, %v2733
      %v2740 = vshrl.u32 2131351028, %v2734
      %v2741 = vor.u32 %v2739, %v2740
      %v2742 = vshll.u32 2131351028, %v2733
      %v2743 = vshrl.u32 2102212464, %v2734
      %v2744 = vor.u32 %v2742, %v2743
      %v2745 = vshll.u32 2102212464, %v2733
      %v2746 = vshrl.u32 920167782, %v2734
      %v2747 = vor.u32 %v2745, %v2746
      %v2748 = vshll.u32 920167782, %v2733
      %v2749 = vshrl.u32 1326507024, %v2734
      %v2750 = vor.u32 %v2748, %v2749
      %vm2751 = vcmp.lt.s32.totalorder %v2732, 1
      %vm2752 = vcmp.lt.s32.totalorder %v2732, 2
      %vm2753 = vcmp.lt.s32.totalorder %v2732, 3
      %vm2754 = vcmp.lt.s32.totalorder %v2732, 4
      %v2755 = vsel %vm2751, %v2735, %v2738
      %v2756 = vsel %vm2754, %v2744, 2102212464
      %v2757 = vsel %vm2753, %v2741, %v2756
      %v2758 = vsel %vm2752, %v2755, %v2757
      %v2759 = vsel %vm2751, %v2738, %v2741
      %v2760 = vsel %vm2754, %v2747, 920167782
      %v2761 = vsel %vm2753, %v2744, %v2760
      %v2762 = vsel %vm2752, %v2759, %v2761
      %v2763 = vsel %vm2751, %v2741, %v2744
      %v2764 = vsel %vm2754, %v2750, 1326507024
      %v2765 = vsel %vm2753, %v2747, %v2764
      %v2766 = vsel %vm2752, %v2763, %v2765
      %v2767 = vshll.u32 %v2727, 8
      %v2768 = vmul.u32.u64.compose %v2767, %v2766
      %v2769 = vextract.low.u32 %v2768
      %v2770 = vextract.high.u32 %v2768
      %v2771 = vmul.u32.u64.compose %v2767, %v2762
      %v2772 = vextract.low.u32 %v2771
      %v2773 = vextract.high.u32 %v2771
      %v2774 = vmul.u32 %v2767, %v2758
      %v2775 = vadd.s32 %v2770, %v2772
      %vm2776 = vc.u32 %v2770, %v2772
      %v2777 = vadd.s32 %v2773, 1
      %v2778 = vsel %vm2776, %v2777, %v2773
      %v2779 = vadd.s32 %v2774, %v2778
      %v2780 = vadd.s32 %v2779, 536870912
      %v2781 = vshrl.u32 %v2780, 30
      %v2782 = vshll.u32 %v2781, 30
      %v2783 = vsub.s32 %v2779, %v2782
      %vm2784 = vcmp.lt.s32.totalorder %v2783, 0
      %v2785 = vsub.s32 0, %v2783
      %v2786 = vsel %vm2784, %v2785, %v2783
      %v2787 = vclz %v2786
      %v2788 = vsub.s32 %v2787, 2
      %vm2789 = vcmp.gt.s32.totalorder 0, %v2788
      %v2790 = vsel %vm2789, 0, %v2788
      %v2791 = vsub.s32 32, %v2790
      %v2792 = vshll.u32 %v2783, %v2790
      %v2793 = vshrl.u32 %v2775, %v2791
      %v2794 = vor.u32 %v2792, %v2793
      %v2795 = vsub.s32 4294967266, %v2790
      %v2796 = vadd.s32 %v2795, 127
      %v2797 = vshll.u32 %v2796, 23
      %v2798 = vor.u32 4788187, %v2797
      %v2799 = vand.u32 2147483647, %v2798
      %v2801 = vcvt.s32.f32 %v2794
      %v2802 = vmul.f32 %v2801, %v2799
      %v2803 = vxor.u32 %v2802, 2147483648
      %v2804 = vsel %vm2721, %v2803, %v2802
      %v2805 = vsub.s32 4, %v2781
      %v2806 = vsel %vm2721, %v2805, %v2781
      %v2807 = vsel %vm2720, %v1365, %v2804
      %v2808 = vsel %vm2720, 0, %v2806
      %v2809 = vcosq.f32.pop %v2807
      %v2810 = vsinq.f32.pop %v2807
      %vm2811 = vweird.f32 %v1365
      %v2812 = vand.u32 %v2808, 3
      %vm2813 = vcmp.lt.s32.totalorder %v2812, 2
      %vm2814 = vcmp.eq.s32.totalorder %v2812, 0
      %v2815 = vxor.u32 %v2810, 2147483648
      %v2816 = vsel %vm2814, %v2809, %v2815
      %vm2817 = vcmp.eq.s32.totalorder %v2812, 2
      %v2818 = vxor.u32 %v2809, 2147483648
      %v2819 = vsel %vm2817, %v2818, %v2810
      %v2820 = vsel %vm2813, %v2816, %v2819
      %v2821 = vsel %vm2811, nan, %v2820
      %v2822 = vand.u32 2147483647, %v1371
      %vm2823 = vcmp.le.f32.partialorder %v2822, 0.7853982
      %vm2824 = vcmp.lt.s32.totalorder %v1371, 0
      %v2825 = vand.u32 %v1371, 2139095040
      %v2826 = vshrl.u32 %v2825, 23
      %v2827 = vsub.s32 %v2826, 127
      %v2828 = vand.u32 2147483647, %v1371
      %v2829 = vand.u32 %v2828, 8388607
      %v2830 = vor.u32 %v2829, 8388608
      %v2831 = vsub.s32 0, %v2830
      %v2832 = vadd.s32 %v2827, 1
      %vm2833 = vcmp.gt.s32.totalorder %v2832, 0
      %v2834 = vsel %vm2833, %v2832, 0
      %v2835 = vshrl.u32 %v2834, 5
      %v2836 = vand.u32 %v2834, 31
      %v2837 = vsub.s32 32, %v2836
      %v2838 = vshrl.u32 683565275, %v2837
      %v2839 = vshll.u32 683565275, %v2836
      %v2840 = vshrl.u32 2475754826, %v2837
      %v2841 = vor.u32 %v2839, %v2840
      %v2842 = vshll.u32 2475754826, %v2836
      %v2843 = vshrl.u32 2131351028, %v2837
      %v2844 = vor.u32 %v2842, %v2843
      %v2845 = vshll.u32 2131351028, %v2836
      %v2846 = vshrl.u32 2102212464, %v2837
      %v2847 = vor.u32 %v2845, %v2846
      %v2848 = vshll.u32 2102212464, %v2836
      %v2849 = vshrl.u32 920167782, %v2837
      %v2850 = vor.u32 %v2848, %v2849
      %v2851 = vshll.u32 920167782, %v2836
      %v2852 = vshrl.u32 1326507024, %v2837
      %v2853 = vor.u32 %v2851, %v2852
      %vm2854 = vcmp.lt.s32.totalorder %v2835, 1
      %vm2855 = vcmp.lt.s32.totalorder %v2835, 2
      %vm2856 = vcmp.lt.s32.totalorder %v2835, 3
      %vm2857 = vcmp.lt.s32.totalorder %v2835, 4
      %v2858 = vsel %vm2854, %v2838, %v2841
      %v2859 = vsel %vm2857, %v2847, 2102212464
      %v2860 = vsel %vm2856, %v2844, %v2859
      %v2861 = vsel %vm2855, %v2858, %v2860
      %v2862 = vsel %vm2854, %v2841, %v2844
      %v2863 = vsel %vm2857, %v2850, 920167782
      %v2864 = vsel %vm2856, %v2847, %v2863
      %v2865 = vsel %vm2855, %v2862, %v2864
      %v2866 = vsel %vm2854, %v2844, %v2847
      %v2867 = vsel %vm2857, %v2853, 1326507024
      %v2868 = vsel %vm2856, %v2850, %v2867
      %v2869 = vsel %vm2855, %v2866, %v2868
      %v2870 = vshll.u32 %v2830, 8
      %v2871 = vmul.u32.u64.compose %v2870, %v2869
      %v2872 = vextract.low.u32 %v2871
      %v2873 = vextract.high.u32 %v2871
      %v2874 = vmul.u32.u64.compose %v2870, %v2865
      %v2875 = vextract.low.u32 %v2874
      %v2876 = vextract.high.u32 %v2874
      %v2877 = vmul.u32 %v2870, %v2861
      %v2878 = vadd.s32 %v2873, %v2875
      %vm2879 = vc.u32 %v2873, %v2875
      %v2880 = vadd.s32 %v2876, 1
      %v2881 = vsel %vm2879, %v2880, %v2876
      %v2882 = vadd.s32 %v2877, %v2881
      %v2883 = vadd.s32 %v2882, 536870912
      %v2884 = vshrl.u32 %v2883, 30
      %v2885 = vshll.u32 %v2884, 30
      %v2886 = vsub.s32 %v2882, %v2885
      %vm2887 = vcmp.lt.s32.totalorder %v2886, 0
      %v2888 = vsub.s32 0, %v2886
      %v2889 = vsel %vm2887, %v2888, %v2886
      %v2890 = vclz %v2889
      %v2891 = vsub.s32 %v2890, 2
      %vm2892 = vcmp.gt.s32.totalorder 0, %v2891
      %v2893 = vsel %vm2892, 0, %v2891
      %v2894 = vsub.s32 32, %v2893
      %v2895 = vshll.u32 %v2886, %v2893
      %v2896 = vshrl.u32 %v2878, %v2894
      %v2897 = vor.u32 %v2895, %v2896
      %v2898 = vsub.s32 4294967266, %v2893
      %v2899 = vadd.s32 %v2898, 127
      %v2900 = vshll.u32 %v2899, 23
      %v2901 = vor.u32 4788187, %v2900
      %v2902 = vand.u32 2147483647, %v2901
      %v2904 = vcvt.s32.f32 %v2897
      %v2905 = vmul.f32 %v2904, %v2902
      %v2906 = vxor.u32 %v2905, 2147483648
      %v2907 = vsel %vm2824, %v2906, %v2905
      %v2908 = vsub.s32 4, %v2884
      %v2909 = vsel %vm2824, %v2908, %v2884
      %v2910 = vsel %vm2823, %v1371, %v2907
      %v2911 = vsel %vm2823, 0, %v2909
      %v2912 = vcosq.f32.pop %v2910
      %v2913 = vsinq.f32.pop %v2910
      %vm2914 = vweird.f32 %v1371
      %v2915 = vand.u32 %v2911, 3
      %vm2916 = vcmp.lt.s32.totalorder %v2915, 2
      %vm2917 = vcmp.eq.s32.totalorder %v2915, 0
      %v2918 = vxor.u32 %v2913, 2147483648
      %v2919 = vsel %vm2917, %v2912, %v2918
      %vm2920 = vcmp.eq.s32.totalorder %v2915, 2
      %v2921 = vxor.u32 %v2912, 2147483648
      %v2922 = vsel %vm2920, %v2921, %v2913
      %v2923 = vsel %vm2916, %v2919, %v2922
      %v2924 = vsel %vm2914, nan, %v2923
      %v2925 = vand.u32 2147483647, %v1377
      %vm2926 = vcmp.le.f32.partialorder %v2925, 0.7853982
      %vm2927 = vcmp.lt.s32.totalorder %v1377, 0
      %v2928 = vand.u32 %v1377, 2139095040
      %v2929 = vshrl.u32 %v2928, 23
      %v2930 = vsub.s32 %v2929, 127
      %v2931 = vand.u32 2147483647, %v1377
      %v2932 = vand.u32 %v2931, 8388607
      %v2933 = vor.u32 %v2932, 8388608
      %v2934 = vsub.s32 0, %v2933
      %v2935 = vadd.s32 %v2930, 1
      %vm2936 = vcmp.gt.s32.totalorder %v2935, 0
      %v2937 = vsel %vm2936, %v2935, 0
      %v2938 = vshrl.u32 %v2937, 5
      %v2939 = vand.u32 %v2937, 31
      %v2940 = vsub.s32 32, %v2939
      %v2941 = vshrl.u32 683565275, %v2940
      %v2942 = vshll.u32 683565275, %v2939
      %v2943 = vshrl.u32 2475754826, %v2940
      %v2944 = vor.u32 %v2942, %v2943
      %v2945 = vshll.u32 2475754826, %v2939
      %v2946 = vshrl.u32 2131351028, %v2940
      %v2947 = vor.u32 %v2945, %v2946
      %v2948 = vshll.u32 2131351028, %v2939
      %v2949 = vshrl.u32 2102212464, %v2940
      %v2950 = vor.u32 %v2948, %v2949
      %v2951 = vshll.u32 2102212464, %v2939
      %v2952 = vshrl.u32 920167782, %v2940
      %v2953 = vor.u32 %v2951, %v2952
      %v2954 = vshll.u32 920167782, %v2939
      %v2955 = vshrl.u32 1326507024, %v2940
      %v2956 = vor.u32 %v2954, %v2955
      %vm2957 = vcmp.lt.s32.totalorder %v2938, 1
      %vm2958 = vcmp.lt.s32.totalorder %v2938, 2
      %vm2959 = vcmp.lt.s32.totalorder %v2938, 3
      %vm2960 = vcmp.lt.s32.totalorder %v2938, 4
      %v2961 = vsel %vm2957, %v2941, %v2944
      %v2962 = vsel %vm2960, %v2950, 2102212464
      %v2963 = vsel %vm2959, %v2947, %v2962
      %v2964 = vsel %vm2958, %v2961, %v2963
      %v2965 = vsel %vm2957, %v2944, %v2947
      %v2966 = vsel %vm2960, %v2953, 920167782
      %v2967 = vsel %vm2959, %v2950, %v2966
      %v2968 = vsel %vm2958, %v2965, %v2967
      %v2969 = vsel %vm2957, %v2947, %v2950
      %v2970 = vsel %vm2960, %v2956, 1326507024
      %v2971 = vsel %vm2959, %v2953, %v2970
      %v2972 = vsel %vm2958, %v2969, %v2971
      %v2973 = vshll.u32 %v2933, 8
      %v2974 = vmul.u32.u64.compose %v2973, %v2972
      %v2975 = vextract.low.u32 %v2974
      %v2976 = vextract.high.u32 %v2974
      %v2977 = vmul.u32.u64.compose %v2973, %v2968
      %v2978 = vextract.low.u32 %v2977
      %v2979 = vextract.high.u32 %v2977
      %v2980 = vmul.u32 %v2973, %v2964
      %v2981 = vadd.s32 %v2976, %v2978
      %vm2982 = vc.u32 %v2976, %v2978
      %v2983 = vadd.s32 %v2979, 1
      %v2984 = vsel %vm2982, %v2983, %v2979
      %v2985 = vadd.s32 %v2980, %v2984
      %v2986 = vadd.s32 %v2985, 536870912
      %v2987 = vshrl.u32 %v2986, 30
      %v2988 = vshll.u32 %v2987, 30
      %v2989 = vsub.s32 %v2985, %v2988
      %vm2990 = vcmp.lt.s32.totalorder %v2989, 0
      %v2991 = vsub.s32 0, %v2989
      %v2992 = vsel %vm2990, %v2991, %v2989
      %v2993 = vclz %v2992
      %v2994 = vsub.s32 %v2993, 2
      %vm2995 = vcmp.gt.s32.totalorder 0, %v2994
      %v2996 = vsel %vm2995, 0, %v2994
      %v2997 = vsub.s32 32, %v2996
      %v2998 = vshll.u32 %v2989, %v2996
      %v2999 = vshrl.u32 %v2981, %v2997
      %v3000 = vor.u32 %v2998, %v2999
      %v3001 = vsub.s32 4294967266, %v2996
      %v3002 = vadd.s32 %v3001, 127
      %v3003 = vshll.u32 %v3002, 23
      %v3004 = vor.u32 4788187, %v3003
      %v3005 = vand.u32 2147483647, %v3004
      %v3007 = vcvt.s32.f32 %v3000
      %v3008 = vmul.f32 %v3007, %v3005
      %v3009 = vxor.u32 %v3008, 2147483648
      %v3010 = vsel %vm2927, %v3009, %v3008
      %v3011 = vsub.s32 4, %v2987
      %v3012 = vsel %vm2927, %v3011, %v2987
      %v3013 = vsel %vm2926, %v1377, %v3010
      %v3014 = vsel %vm2926, 0, %v3012
      %v3015 = vcosq.f32.pop %v3013
      %v3016 = vsinq.f32.pop %v3013
      %vm3017 = vweird.f32 %v1377
      %v3018 = vand.u32 %v3014, 3
      %vm3019 = vcmp.lt.s32.totalorder %v3018, 2
      %vm3020 = vcmp.eq.s32.totalorder %v3018, 0
      %v3021 = vxor.u32 %v3016, 2147483648
      %v3022 = vsel %vm3020, %v3015, %v3021
      %vm3023 = vcmp.eq.s32.totalorder %v3018, 2
      %v3024 = vxor.u32 %v3015, 2147483648
      %v3025 = vsel %vm3023, %v3024, %v3016
      %v3026 = vsel %vm3019, %v3022, %v3025
      %v3027 = vsel %vm3017, nan, %v3026
      %3028 = vst [vmem:[%s172] sm:$0xff] %v1482
      %3029 = vst [vmem:[%s172 + $0x8] sm:$0xff] %v1585
      %3030 = vst [vmem:[%s172 + $0x10] sm:$0xff] %v1688
      %3031 = vst [vmem:[%s172 + $0x18] sm:$0xff] %v1791
      %3032 = vst [vmem:[%s172 + $0x20] sm:$0xff] %v1894
      %3033 = vst [vmem:[%s172 + $0x28] sm:$0xff] %v1997
      %3034 = vst [vmem:[%s172 + $0x30] sm:$0xff] %v2100
      %3035 = vst [vmem:[%s172 + $0x38] sm:$0xff] %v2203
      %3036 = vst [vmem:[%s172 + $0x40] sm:$0xff] %v2306
      %3037 = vst [vmem:[%s172 + $0x48] sm:$0xff] %v2409
      %3038 = vst [vmem:[%s172 + $0x50] sm:$0xff] %v2512
      %3039 = vst [vmem:[%s172 + $0x58] sm:$0xff] %v2615
      %3040 = vst [vmem:[%s172 + $0x60] sm:$0xff] %v2718
      %3041 = vst [vmem:[%s172 + $0x68] sm:$0xff] %v2821
      %3042 = vst [vmem:[%s172 + $0x70] sm:$0xff] %v2924
      %3043 = vst [vmem:[%s172 + $0x78] sm:$0xff] %v3027
      %s3044 = smul.u32 16, %s14
      %p3045 = scmp.lt.s32.totalorder %s3044, 31
      %s3046 = scalar_select %p3045, %s3044, 31
      %s3047 = smul.addr %s3046, 8
      %s3048 = scalar_lea.vmem %s3, %s3047
      // Predicated region
      $region33: #{qnn_forward.1} parent=31 // pred_check
        %p3049 = pneg %p100
      $region34: #{qnn_forward.1} parent=31 // pred_check_branch
        %3051 = sbr.rel (%p3049) target = $region36
      $region35: #{qnn_forward.1} parent=31 // pred_region
        %s3052 = smul.u32 16, %s14
      $region36: #{qnn_forward.1} parent=31 // pred_fallthru
        _
    $region32: #{qnn_forward.1} parent=5 // pred_fallthru
      _
    %p3053 = scmp.le.s32.totalorder 2, %s9
    // Predicated region
    $region37: #{qnn_forward.1} parent=5 // pred_check
      %p3054 = pneg %p3053
    $region38: #{qnn_forward.1} parent=5 // pred_check_branch
      %3056 = sbr.rel (%p3054) target = $region40
    $region39: #{qnn_forward.1} parent=5 // pred_region
      %s3057 = ssub.s32 %s9, 2
      // Predicated region
      $region41: #{qnn_forward.1} parent=39 // pred_check
        %p3058 = pneg %p106
      $region42: #{qnn_forward.1} parent=39 // pred_check_branch
        %3060 = sbr.rel (%p3058) target = $region44
      $region43: #{qnn_forward.1} parent=39 // pred_region
        %s3061 = smul.u32 16, %s15
        %p3062 = scmp.lt.s32.totalorder %s3061, 31
        %s3063 = scalar_select %p3062, %s3061, 31
        %s3064 = smul.addr %s3063, 8
        %s3065 = scalar_lea.vmem %s3, %s3064
      $region44: #{qnn_forward.1} parent=39 // pred_fallthru
        _
    $region40: #{qnn_forward.1} parent=5 // pred_fallthru
      _
  $region6: #{qnn_forward.1} parent=0 // loop_footer
    %s13 = sadd.s32 1, %s9
  $region7: #{qnn_forward.1} parent=0 // loop_footer_branch
    %8 = sbr.rel target = $region3
  $region8: #{qnn_forward.1} parent=0 // loop_exit
    _

</llo_original>
